<compile_context>
chip_gen: v5e
topology: v5e:2x2
jax: 0.10.0
libtpu: 0.0.40
codegen_flags: <defaults>
</compile_context>

<pallas_src>
import functools

import jax
import jax.numpy as jnp
from jax import lax
from jax.experimental import pallas as pl
from jax.experimental.pallas import tpu as pltpu


_NEG_INF = -1e9   # additive key-padding bias (see TODO in kernel)


def _layer_norm(x, gamma, beta, eps=1e-5):
    mean = jnp.mean(x, axis=-1, keepdims=True)
    xc = x - mean
    var = jnp.mean(xc * xc, axis=-1, keepdims=True)
    return xc * lax.rsqrt(var + eps) * gamma + beta


def _vmem_limit_bytes():
    """Generation-aware scoped-VMEM cap: ~96 MiB on 128-MiB parts (v5e/v6e),
    ~48 MiB on v7x's 64-MiB VMEM; always leaves compiler headroom."""
    try:
        cap = getattr(pltpu.get_tpu_info(), "vmem_capacity_bytes", None) or (128 << 20)
    except Exception:
        cap = 128 << 20
    return int(min(cap * 3 // 4, 96 << 20))


def _batch_tile(B, L):
    """Batch items folded per grid step.  Target ~256 GEMM rows per step for the
    MXU while keeping >= 2 'parallel' grid steps (v7x has 2 TensorCores)."""
    best = 1
    for bt in range(1, B // 2 + 1):          # guarantees B // bt >= 2
        if B % bt == 0 and (bt * L <= 256 or bt == 1):
            best = bt
    return best


# --------------------------------------------------------------------------- #
# Fused whole-stack kernel
# --------------------------------------------------------------------------- #
def fft_duration_kernel(lens_ref, x_ref,
                        win_ref, bin_ref, wout_ref, bout_ref, g1_ref, be1_ref,
                        w1_ref, b1_ref, w2_ref, b2_ref, g2_ref, be2_ref,
                        wdur_ref, bdur_ref, o_ref,
                        *, n_heads, n_layers, batch_tile, compute_dtype):
    b = pl.program_id(0)
    bt = batch_tile
    _, L, D = x_ref.shape                     # block is (bt, L, D)
    M = bt * L
    dh = D // n_heads
    scale = 1.0 / float(dh) ** 0.5
    cdt = compute_dtype

    # Key-padding additive bias from the SMEM-prefetched lengths.
    # TODO(synk): PyTorch masks with -inf; -1e9 keeps padded keys at ~0
    # probability and avoids NaN rows when a length is 0.
    key_pos = lax.broadcasted_iota(jnp.int32, (1, L), 1)
    rows = [jnp.where(key_pos >= lens_ref[b * bt + bi], _NEG_INF, 0.0)
                .astype(jnp.float32) for bi in range(bt)]
    att_bias = (rows[0] if bt == 1 else jnp.concatenate(rows, axis=0)).reshape(bt, 1, L)

    x = x_ref[...].astype(jnp.float32).reshape(M, D)   # activation resident in VMEM

    for l in range(n_layers):                          # static unroll over layers
        # ---- masked multi-head self-attention (+ residual + LayerNorm) ----
        # Fused QKV projection: one (bt*L, D) @ (D, 3D) MXU GEMM (batch in M).
        qkv = jnp.dot(x.astype(cdt), win_ref[l],
                      preferred_element_type=jnp.float32) + bin_ref[l]
        qkv3 = qkv.reshape(bt, L, 3 * D)
        wout_l = wout_ref[l]
        attn = jnp.zeros((M, D), jnp.float32)
        # TODO(synk): for long sequences (L ~ 1k+) switch this to a KV-tiled
        # online-softmax (flash) loop so the (bt, L, L) score matrix stays bounded.
        # TODO(synk): dh=16 head slices split a 128-lane vreg; real configs should
        # pick D / dh as multiples of 128 (model/layout choice, not kernel's).
        for h in range(n_heads):                       # static unroll over heads
            q = qkv3[:, :, h * dh:(h + 1) * dh] * scale
            k = qkv3[:, :, D + h * dh:D + (h + 1) * dh]
            v = qkv3[:, :, 2 * D + h * dh:2 * D + (h + 1) * dh]
            s = jnp.einsum("bqd,bkd->bqk", q.astype(cdt), k.astype(cdt),
                           preferred_element_type=jnp.float32) + att_bias
            s = s - jnp.max(s, axis=-1, keepdims=True)
            p = jnp.exp(s)
            p = p * pl.reciprocal(jnp.sum(p, axis=-1, keepdims=True), approx=True)
            ctx = jnp.einsum("bqk,bkd->bqd", p.astype(cdt), v.astype(cdt),
                             preferred_element_type=jnp.float32)
            # Per-head out-projection accumulation (no head concat / relayout).
            attn = attn + jnp.dot(ctx.reshape(M, dh).astype(cdt),
                                  wout_l[h * dh:(h + 1) * dh, :],
                                  preferred_element_type=jnp.float32)
        attn = attn + bout_ref[l]
        # TODO(synk): dropout layers are identity in eval mode and not reproduced.
        x = _layer_norm(x + attn, g1_ref[l], be1_ref[l])

        # ---- feed-forward (+ residual + LayerNorm), batch folded into rows ----
        hdn = jnp.dot(x.astype(cdt), w1_ref[l],
                      preferred_element_type=jnp.float32) + b1_ref[l]
        hdn = jnp.maximum(hdn, 0.0)
        ffn = jnp.dot(hdn.astype(cdt), w2_ref[l],
                      preferred_element_type=jnp.float32) + b2_ref[l]
        x = _layer_norm(x + ffn, g2_ref[l], be2_ref[l])

    # ---- duration head, fused: (D -> 1) projection as VPU mul + lane reduce,
    # emitted lane-dense as (bt, 1, L) (long axis on lanes, no (M, 1) store) ----
    dur = jnp.sum(x.reshape(bt, L, D) * wdur_ref[...].reshape(1, 1, D),
                  axis=-1) + bdur_ref[...]
    o_ref[...] = dur.reshape(bt, 1, L).astype(o_ref.dtype)


# --------------------------------------------------------------------------- #
# Wrapper
# --------------------------------------------------------------------------- #
def duration_predictor_forward(encoder_input, text_lengths, params, n_heads,
                               compute_dtype=jnp.bfloat16):
    """encoder_input: (B, L, D) f32, text_lengths: (B,) int -> (L, B, 1) f32."""
    B, L, D = encoder_input.shape
    layers = params["layers"]
    NL = len(layers)
    FF = layers[0]["w1"].shape[1]
    assert D % n_heads == 0

    x = encoder_input.astype(jnp.float32)
    lengths = text_lengths.astype(jnp.int32)

    # Stack per-layer params to (NL, ...) so the fused kernel slices statically;
    # cast MXU weight operands once here (biases / LayerNorm params stay f32).
    stack = lambda name: jnp.stack([lp[name] for lp in layers], axis=0)
    win = stack("win").astype(compute_dtype)
    wout = stack("wout").astype(compute_dtype)
    w1 = stack("w1").astype(compute_dtype)
    w2 = stack("w2").astype(compute_dtype)
    bin_ = stack("bin")
    bout = stack("bout")
    g1, be1 = stack("g1"), stack("be1")
    b1, b2 = stack("b1"), stack("b2")
    g2, be2 = stack("g2"), stack("be2")
    w_dur_row = params["w_dur"].reshape(1, D).astype(jnp.float32)   # VPU path: f32
    b_dur = params["b_dur"].reshape(1, 1).astype(jnp.float32)

    Bt = _batch_tile(B, L)
    grid = (B // Bt,)
    inv3 = lambda b, lens: (0, 0, 0)          # grid-invariant full weight blocks
    inv2 = lambda b, lens: (0, 0)
    # TODO(synk): pl.Buffered(1) on the grid-invariant weight specs would halve
    # their VMEM footprint on v7x; omitted since the weights are tiny vs. the limit.

    dur3 = pl.pallas_call(
        functools.partial(fft_duration_kernel, n_heads=n_heads, n_layers=NL,
                          batch_tile=Bt, compute_dtype=compute_dtype),
        out_shape=jax.ShapeDtypeStruct((B, 1, L), jnp.float32),
        grid_spec=pltpu.PrefetchScalarGridSpec(
            num_scalar_prefetch=1,            # lengths -> SMEM
            grid=grid,
            in_specs=[
                pl.BlockSpec((Bt, L, D), lambda b, lens: (b, 0, 0)),   # x
                pl.BlockSpec((NL, D, 3 * D), inv3),                    # win
                pl.BlockSpec((NL, 1, 3 * D), inv3),                    # bin
                pl.BlockSpec((NL, D, D), inv3),                        # wout
                pl.BlockSpec((NL, 1, D), inv3),                        # bout
                pl.BlockSpec((NL, 1, D), inv3),                        # g1
                pl.BlockSpec((NL, 1, D), inv3),                        # be1
                pl.BlockSpec((NL, D, FF), inv3),                       # w1
                pl.BlockSpec((NL, 1, FF), inv3),                       # b1
                pl.BlockSpec((NL, FF, D), inv3),                       # w2
                pl.BlockSpec((NL, 1, D), inv3),                        # b2
                pl.BlockSpec((NL, 1, D), inv3),                        # g2
                pl.BlockSpec((NL, 1, D), inv3),                        # be2
                pl.BlockSpec((1, D), inv2),                            # w_dur row
                pl.BlockSpec((1, 1), inv2),                            # b_dur
            ],
            out_specs=pl.BlockSpec((Bt, 1, L), lambda b, lens: (b, 0, 0)),
        ),
        compiler_params=pltpu.CompilerParams(
            dimension_semantics=("parallel",),
            vmem_limit_bytes=_vmem_limit_bytes()),
    )(lengths, x, win, bin_, wout, bout, g1, be1, w1, b1, w2, b2, g2, be2,
      w_dur_row, b_dur)

    # TODO(synk): the per-layer attention alignments returned by FFT are unused
    # by DurationPredictor's output and are not materialized.
    # (B, 1, L) -> (L, B, 1), matching Linear(FFT(x).transpose(0, 1)).
    return dur3.transpose(2, 0, 1)


# --------------------------------------------------------------------------- #
# Pure-JAX reference & parameter init
# --------------------------------------------------------------------------- #
def _ref_layer(x, lengths, lp, n_heads):
    B, L, D = x.shape
    dh = D // n_heads
    hp = lax.Precision.HIGHEST
    bias = jnp.where(jnp.arange(L)[None, :] >= lengths[:, None], _NEG_INF, 0.0)
    qkv = jnp.matmul(x, lp["win"], precision=hp) + lp["bin"]
    q, k, v = jnp.split(qkv, 3, axis=-1)
    heads = lambda t: t.reshape(B, L, n_heads, dh).transpose(0, 2, 1, 3)
    q, k, v = heads(q) * (float(dh) ** -0.5), heads(k), heads(v)
    s = jnp.einsum("bhqd,bhkd->bhqk", q, k, precision=hp) + bias[:, None, None, :]
    p = jax.nn.softmax(s, axis=-1)
    ctx = jnp.einsum("bhqk,bhkd->bhqd", p, v, precision=hp)
    ctx = ctx.transpose(0, 2, 1, 3).reshape(B, L, D)
    attn_out = jnp.matmul(ctx, lp["wout"], precision=hp) + lp["bout"]
    x = _layer_norm(x + attn_out, lp["g1"], lp["be1"])
    h = jax.nn.relu(jnp.matmul(x, lp["w1"], precision=hp) + lp["b1"])
    y = jnp.matmul(h, lp["w2"], precision=hp) + lp["b2"]
    return _layer_norm(x + y, lp["g2"], lp["be2"])


def ref_forward(encoder_input, text_lengths, params, n_heads):
    x = encoder_input
    for lp in params["layers"]:
        x = _ref_layer(x, text_lengths, lp, n_heads)
    out = jnp.matmul(x, params["w_dur"], precision=lax.Precision.HIGHEST)
    out = out + params["b_dur"]
    return out.transpose(1, 0, 2)


def init_params(key, D, ff, n_layers):
    dense = lambda k, shape, s: s * jax.random.normal(k, shape, jnp.float32)
    layers = []
    keys = jax.random.split(key, n_layers + 1)
    for i in range(n_layers):
        ks = jax.random.split(keys[i], 12)
        layers.append(dict(
            win=dense(ks[0], (D, 3 * D), 0.3), bin=dense(ks[1], (1, 3 * D), 0.1),
            wout=dense(ks[2], (D, D), 0.3),    bout=dense(ks[3], (1, D), 0.1),
            g1=1.0 + dense(ks[4], (1, D), 0.1), be1=dense(ks[5], (1, D), 0.1),
            w1=dense(ks[6], (D, ff), 0.3),     b1=dense(ks[7], (1, ff), 0.1),
            w2=dense(ks[8], (ff, D), 0.3),     b2=dense(ks[9], (1, D), 0.1),
            g2=1.0 + dense(ks[10], (1, D), 0.1), be2=dense(ks[11], (1, D), 0.1)))
    kf = jax.random.split(keys[-1], 2)
    return dict(layers=layers,
                w_dur=dense(kf[0], (D, 1), 0.3),
                b_dur=dense(kf[1], (1, 1), 0.1))


if __name__ == "__main__":
    # hp: hidden_dim=32, n_heads=2, ff_dim=64, n_layers=2; batch=2, seq=8.
    B, L, D, H, FF, NL = 2, 8, 32, 2, 64, 2

    key = jax.random.PRNGKey(0)
    key, k_x, k_p = jax.random.split(key, 3)
    encoder_input = jax.random.normal(k_x, (B, L, D), dtype=jnp.float32)
    text_lengths = jnp.array([L, 5], dtype=jnp.int32)
    params = init_params(k_p, D, FF, NL)

    ref = ref_forward(encoder_input, text_lengths, params, H)

    # 1) f32 compute path: tight check of the fused algorithm (only the approx
    #    reciprocal in the softmax differs from the reference).
    fwd32 = jax.jit(functools.partial(duration_predictor_forward, n_heads=H,
                                      compute_dtype=jnp.float32))
    out32 = jax.block_until_ready(fwd32(encoder_input, text_lengths, params))
    assert out32.shape == (L, B, 1), out32.shape
    assert jnp.allclose(out32, ref, atol=3e-2, rtol=3e-2), \
        f"f32 max abs diff {jnp.max(jnp.abs(out32 - ref))}"

    # 2) default bf16-MXU-operand path (perf config): looser tolerance.
    fwd16 = jax.jit(functools.partial(duration_predictor_forward, n_heads=H))
    out16 = jax.block_until_ready(fwd16(encoder_input, text_lengths, params))
    assert out16.shape == (L, B, 1), out16.shape
    assert jnp.allclose(out16, ref, atol=1.5e-1, rtol=1e-1), \
        f"bf16 max abs diff {jnp.max(jnp.abs(out16 - ref))}"

    print("KERNEL_OK")
</pallas_src>

<mosaic_0001>
module attributes {stable_mosaic.version = 11 : i64} {
  func.func @fft_duration_kernel(%arg0: i32, %arg1: memref<2xi32, #tpu.memory_space<smem>>, %arg2: memref<1x8x32xf32, #tpu.memory_space<vmem>>, %arg3: memref<2x32x96xf32, #tpu.memory_space<vmem>>, %arg4: memref<2x1x96xf32, #tpu.memory_space<vmem>>, %arg5: memref<2x32x32xf32, #tpu.memory_space<vmem>>, %arg6: memref<2x1x32xf32, #tpu.memory_space<vmem>>, %arg7: memref<2x1x32xf32, #tpu.memory_space<vmem>>, %arg8: memref<2x1x32xf32, #tpu.memory_space<vmem>>, %arg9: memref<2x32x64xf32, #tpu.memory_space<vmem>>, %arg10: memref<2x1x64xf32, #tpu.memory_space<vmem>>, %arg11: memref<2x64x32xf32, #tpu.memory_space<vmem>>, %arg12: memref<2x1x32xf32, #tpu.memory_space<vmem>>, %arg13: memref<2x1x32xf32, #tpu.memory_space<vmem>>, %arg14: memref<2x1x32xf32, #tpu.memory_space<vmem>>, %arg15: memref<1x32xf32, #tpu.memory_space<vmem>>, %arg16: memref<1x1xf32, #tpu.memory_space<vmem>>, %arg17: memref<1x1x8xf32, #tpu.memory_space<vmem>>) attributes {dimension_semantics = [#tpu.dimension_semantics<parallel>], iteration_bounds = array<i64: 2>, scalar_prefetch = 1 : i64, scratch_operands = 0 : i64, tpu.core_type = #tpu.core_type<tc>, window_params = [{transform_indices = @transform_0, window_bounds = array<i64: 1, 8, 32>}, {pipeline_mode = #tpu.pipeline_mode<synchronous>, transform_indices = @transform_1, window_bounds = array<i64: 2, 32, 96>}, {pipeline_mode = #tpu.pipeline_mode<synchronous>, transform_indices = @transform_2, window_bounds = array<i64: 2, 1, 96>}, {pipeline_mode = #tpu.pipeline_mode<synchronous>, transform_indices = @transform_3, window_bounds = array<i64: 2, 32, 32>}, {pipeline_mode = #tpu.pipeline_mode<synchronous>, transform_indices = @transform_4, window_bounds = array<i64: 2, 1, 32>}, {pipeline_mode = #tpu.pipeline_mode<synchronous>, transform_indices = @transform_5, window_bounds = array<i64: 2, 1, 32>}, {pipeline_mode = #tpu.pipeline_mode<synchronous>, transform_indices = @transform_6, window_bounds = array<i64: 2, 1, 32>}, {pipeline_mode = #tpu.pipeline_mode<synchronous>, transform_indices = @transform_7, window_bounds = array<i64: 2, 32, 64>}, {pipeline_mode = #tpu.pipeline_mode<synchronous>, transform_indices = @transform_8, window_bounds = array<i64: 2, 1, 64>}, {pipeline_mode = #tpu.pipeline_mode<synchronous>, transform_indices = @transform_9, window_bounds = array<i64: 2, 64, 32>}, {pipeline_mode = #tpu.pipeline_mode<synchronous>, transform_indices = @transform_10, window_bounds = array<i64: 2, 1, 32>}, {pipeline_mode = #tpu.pipeline_mode<synchronous>, transform_indices = @transform_11, window_bounds = array<i64: 2, 1, 32>}, {pipeline_mode = #tpu.pipeline_mode<synchronous>, transform_indices = @transform_12, window_bounds = array<i64: 2, 1, 32>}, {pipeline_mode = #tpu.pipeline_mode<synchronous>, transform_indices = @transform_13, window_bounds = array<i64: 1, 32>}, {pipeline_mode = #tpu.pipeline_mode<synchronous>, transform_indices = @transform_14, window_bounds = array<i64: 1, 1>}, {transform_indices = @transform_15, window_bounds = array<i64: 1, 1, 8>}]} {
    %0 = tpu.iota {dimensions = array<i32: 1>} : vector<1x8xi32>
    %c1_i32 = arith.constant 1 : i32
    %1 = arith.muli %arg0, %c1_i32 : i32
    %c0_i32 = arith.constant 0 : i32
    %2 = arith.addi %1, %c0_i32 : i32
    %3 = arith.index_cast %2 : i32 to index
    %4 = memref.load %arg1[%3] : memref<2xi32, #tpu.memory_space<smem>>
    %5 = vector.broadcast %4 : i32 to vector<1x8xi32>
    %6 = arith.cmpi sge, %0, %5 : vector<1x8xi32>
    %cst = arith.constant -1.000000e+09 : f32
    %cst_0 = arith.constant 0.000000e+00 : f32
    %7 = vector.broadcast %cst : f32 to vector<1x8xf32>
    %8 = vector.broadcast %cst_0 : f32 to vector<1x8xf32>
    %9 = arith.select %6, %7, %8 : vector<1x8xi1>, vector<1x8xf32>
    %10 = vector.shape_cast %9 : vector<1x8xf32> to vector<1x1x8xf32>
    %c0 = arith.constant 0 : index
    %c0_1 = arith.constant 0 : index
    %c0_2 = arith.constant 0 : index
    %11 = vector.load %arg2[%c0, %c0_1, %c0_2] : memref<1x8x32xf32, #tpu.memory_space<vmem>>, vector<1x8x32xf32>
    %12 = vector.shape_cast %11 : vector<1x8x32xf32> to vector<8x32xf32>
    %c0_3 = arith.constant 0 : index
    %c0_4 = arith.constant 0 : index
    %c0_5 = arith.constant 0 : index
    %13 = vector.load %arg3[%c0_3, %c0_4, %c0_5] : memref<2x32x96xf32, #tpu.memory_space<vmem>>, vector<1x32x96xf32>
    %14 = vector.shape_cast %13 : vector<1x32x96xf32> to vector<32x96xf32>
    %cst_6 = arith.constant dense<0.000000e+00> : vector<8x96xf32>
    %15 = tpu.matmul %12, %14, %cst_6 {dimension_numbers = #tpu.dot_dimension_numbers<[1], [0], [0], [1], [0, 0, 1, 1], [], []>} : vector<8x32xf32>, vector<32x96xf32>, vector<8x96xf32> -> vector<8x96xf32>
    %c0_7 = arith.constant 0 : index
    %c0_8 = arith.constant 0 : index
    %c0_9 = arith.constant 0 : index
    %16 = vector.load %arg4[%c0_7, %c0_8, %c0_9] : memref<2x1x96xf32, #tpu.memory_space<vmem>>, vector<1x1x96xf32>
    %17 = vector.shape_cast %16 : vector<1x1x96xf32> to vector<1x96xf32>
    %18 = vector.broadcast %17 : vector<1x96xf32> to vector<8x96xf32>
    %19 = arith.addf %15, %18 : vector<8x96xf32>
    %20 = vector.shape_cast %19 : vector<8x96xf32> to vector<1x8x96xf32>
    %c0_10 = arith.constant 0 : index
    %c0_11 = arith.constant 0 : index
    %c0_12 = arith.constant 0 : index
    %21 = vector.load %arg5[%c0_10, %c0_11, %c0_12] : memref<2x32x32xf32, #tpu.memory_space<vmem>>, vector<1x32x32xf32>
    %22 = vector.shape_cast %21 : vector<1x32x32xf32> to vector<32x32xf32>
    %cst_13 = arith.constant 0.000000e+00 : f32
    %23 = vector.broadcast %cst_13 : f32 to vector<8x32xf32>
    %24 = vector.extract_strided_slice %20 {offsets = [0, 0, 0], sizes = [1, 8, 16], strides = [1, 1, 1]} : vector<1x8x96xf32> to vector<1x8x16xf32>
    %cst_14 = arith.constant 2.500000e-01 : f32
    %25 = vector.broadcast %cst_14 : f32 to vector<1x8x16xf32>
    %26 = arith.mulf %24, %25 : vector<1x8x16xf32>
    %27 = vector.extract_strided_slice %20 {offsets = [0, 0, 32], sizes = [1, 8, 16], strides = [1, 1, 1]} : vector<1x8x96xf32> to vector<1x8x16xf32>
    %28 = vector.extract_strided_slice %20 {offsets = [0, 0, 64], sizes = [1, 8, 16], strides = [1, 1, 1]} : vector<1x8x96xf32> to vector<1x8x16xf32>
    "tpu.trace_start"() <{level = 10 : i32, message = "bqd,bkd->bqk"}> : () -> ()
    %cst_15 = arith.constant dense<0.000000e+00> : vector<1x8x8xf32>
    %29 = tpu.matmul %26, %27, %cst_15 {dimension_numbers = #tpu.dot_dimension_numbers<[2], [2], [1], [1], [0, 0, 0, 1, 1, 1], [0], [0]>} : vector<1x8x16xf32>, vector<1x8x16xf32>, vector<1x8x8xf32> -> vector<1x8x8xf32>
    "tpu.trace_stop"() : () -> ()
    %30 = vector.broadcast %10 : vector<1x1x8xf32> to vector<1x8x8xf32>
    %31 = arith.addf %29, %30 : vector<1x8x8xf32>
    %cst_16 = arith.constant dense<0xFF800000> : vector<1x8xf32>
    %32 = vector.multi_reduction <maximumf>, %31, %cst_16 [2] : vector<1x8x8xf32> to vector<1x8xf32>
    %33 = vector.shape_cast %32 : vector<1x8xf32> to vector<1x8x1xf32>
    %34 = vector.broadcast %33 : vector<1x8x1xf32> to vector<1x8x8xf32>
    %35 = arith.subf %31, %34 : vector<1x8x8xf32>
    %36 = math.exp %35 : vector<1x8x8xf32>
    %cst_17 = arith.constant dense<0.000000e+00> : vector<1x8xf32>
    %37 = vector.multi_reduction <add>, %36, %cst_17 [2] : vector<1x8x8xf32> to vector<1x8xf32>
    %38 = vector.shape_cast %37 : vector<1x8xf32> to vector<1x8x1xf32>
    %39 = tpu.reciprocal %38 {approx = true} : vector<1x8x1xf32> -> vector<1x8x1xf32>
    %40 = vector.broadcast %39 : vector<1x8x1xf32> to vector<1x8x8xf32>
    %41 = arith.mulf %36, %40 : vector<1x8x8xf32>
    "tpu.trace_start"() <{level = 10 : i32, message = "bqk,bkd->bqd"}> : () -> ()
    %cst_18 = arith.constant dense<0.000000e+00> : vector<1x8x16xf32>
    %42 = tpu.matmul %41, %28, %cst_18 {dimension_numbers = #tpu.dot_dimension_numbers<[2], [1], [1], [2], [0, 0, 0, 1, 1, 2], [0], [0]>} : vector<1x8x8xf32>, vector<1x8x16xf32>, vector<1x8x16xf32> -> vector<1x8x16xf32>
    "tpu.trace_stop"() : () -> ()
    %43 = vector.shape_cast %42 : vector<1x8x16xf32> to vector<8x16xf32>
    %44 = vector.extract_strided_slice %22 {offsets = [0, 0], sizes = [16, 32], strides = [1, 1]} : vector<32x32xf32> to vector<16x32xf32>
    %cst_19 = arith.constant dense<0.000000e+00> : vector<8x32xf32>
    %45 = tpu.matmul %43, %44, %cst_19 {dimension_numbers = #tpu.dot_dimension_numbers<[1], [0], [0], [1], [0, 0, 1, 1], [], []>} : vector<8x16xf32>, vector<16x32xf32>, vector<8x32xf32> -> vector<8x32xf32>
    %46 = arith.addf %23, %45 : vector<8x32xf32>
    %47 = vector.extract_strided_slice %20 {offsets = [0, 0, 16], sizes = [1, 8, 16], strides = [1, 1, 1]} : vector<1x8x96xf32> to vector<1x8x16xf32>
    %cst_20 = arith.constant 2.500000e-01 : f32
    %48 = vector.broadcast %cst_20 : f32 to vector<1x8x16xf32>
    %49 = arith.mulf %47, %48 : vector<1x8x16xf32>
    %50 = vector.extract_strided_slice %20 {offsets = [0, 0, 48], sizes = [1, 8, 16], strides = [1, 1, 1]} : vector<1x8x96xf32> to vector<1x8x16xf32>
    %51 = vector.extract_strided_slice %20 {offsets = [0, 0, 80], sizes = [1, 8, 16], strides = [1, 1, 1]} : vector<1x8x96xf32> to vector<1x8x16xf32>
    "tpu.trace_start"() <{level = 10 : i32, message = "bqd,bkd->bqk"}> : () -> ()
    %cst_21 = arith.constant dense<0.000000e+00> : vector<1x8x8xf32>
    %52 = tpu.matmul %49, %50, %cst_21 {dimension_numbers = #tpu.dot_dimension_numbers<[2], [2], [1], [1], [0, 0, 0, 1, 1, 1], [0], [0]>} : vector<1x8x16xf32>, vector<1x8x16xf32>, vector<1x8x8xf32> -> vector<1x8x8xf32>
    "tpu.trace_stop"() : () -> ()
    %53 = vector.broadcast %10 : vector<1x1x8xf32> to vector<1x8x8xf32>
    %54 = arith.addf %52, %53 : vector<1x8x8xf32>
    %cst_22 = arith.constant dense<0xFF800000> : vector<1x8xf32>
    %55 = vector.multi_reduction <maximumf>, %54, %cst_22 [2] : vector<1x8x8xf32> to vector<1x8xf32>
    %56 = vector.shape_cast %55 : vector<1x8xf32> to vector<1x8x1xf32>
    %57 = vector.broadcast %56 : vector<1x8x1xf32> to vector<1x8x8xf32>
    %58 = arith.subf %54, %57 : vector<1x8x8xf32>
    %59 = math.exp %58 : vector<1x8x8xf32>
    %cst_23 = arith.constant dense<0.000000e+00> : vector<1x8xf32>
    %60 = vector.multi_reduction <add>, %59, %cst_23 [2] : vector<1x8x8xf32> to vector<1x8xf32>
    %61 = vector.shape_cast %60 : vector<1x8xf32> to vector<1x8x1xf32>
    %62 = tpu.reciprocal %61 {approx = true} : vector<1x8x1xf32> -> vector<1x8x1xf32>
    %63 = vector.broadcast %62 : vector<1x8x1xf32> to vector<1x8x8xf32>
    %64 = arith.mulf %59, %63 : vector<1x8x8xf32>
    "tpu.trace_start"() <{level = 10 : i32, message = "bqk,bkd->bqd"}> : () -> ()
    %cst_24 = arith.constant dense<0.000000e+00> : vector<1x8x16xf32>
    %65 = tpu.matmul %64, %51, %cst_24 {dimension_numbers = #tpu.dot_dimension_numbers<[2], [1], [1], [2], [0, 0, 0, 1, 1, 2], [0], [0]>} : vector<1x8x8xf32>, vector<1x8x16xf32>, vector<1x8x16xf32> -> vector<1x8x16xf32>
    "tpu.trace_stop"() : () -> ()
    %66 = vector.shape_cast %65 : vector<1x8x16xf32> to vector<8x16xf32>
    %67 = vector.extract_strided_slice %22 {offsets = [16, 0], sizes = [16, 32], strides = [1, 1]} : vector<32x32xf32> to vector<16x32xf32>
    %cst_25 = arith.constant dense<0.000000e+00> : vector<8x32xf32>
    %68 = tpu.matmul %66, %67, %cst_25 {dimension_numbers = #tpu.dot_dimension_numbers<[1], [0], [0], [1], [0, 0, 1, 1], [], []>} : vector<8x16xf32>, vector<16x32xf32>, vector<8x32xf32> -> vector<8x32xf32>
    %69 = arith.addf %46, %68 : vector<8x32xf32>
    %c0_26 = arith.constant 0 : index
    %c0_27 = arith.constant 0 : index
    %c0_28 = arith.constant 0 : index
    %70 = vector.load %arg6[%c0_26, %c0_27, %c0_28] : memref<2x1x32xf32, #tpu.memory_space<vmem>>, vector<1x1x32xf32>
    %71 = vector.shape_cast %70 : vector<1x1x32xf32> to vector<1x32xf32>
    %72 = vector.broadcast %71 : vector<1x32xf32> to vector<8x32xf32>
    %73 = arith.addf %69, %72 : vector<8x32xf32>
    %74 = arith.addf %12, %73 : vector<8x32xf32>
    %c0_29 = arith.constant 0 : index
    %c0_30 = arith.constant 0 : index
    %c0_31 = arith.constant 0 : index
    %75 = vector.load %arg7[%c0_29, %c0_30, %c0_31] : memref<2x1x32xf32, #tpu.memory_space<vmem>>, vector<1x1x32xf32>
    %76 = vector.shape_cast %75 : vector<1x1x32xf32> to vector<1x32xf32>
    %c0_32 = arith.constant 0 : index
    %c0_33 = arith.constant 0 : index
    %c0_34 = arith.constant 0 : index
    %77 = vector.load %arg8[%c0_32, %c0_33, %c0_34] : memref<2x1x32xf32, #tpu.memory_space<vmem>>, vector<1x1x32xf32>
    %78 = vector.shape_cast %77 : vector<1x1x32xf32> to vector<1x32xf32>
    %cst_35 = arith.constant dense<0.000000e+00> : vector<8xf32>
    %79 = vector.multi_reduction <add>, %74, %cst_35 [1] : vector<8x32xf32> to vector<8xf32>
    %80 = vector.shape_cast %79 : vector<8xf32> to vector<8x1xf32>
    %cst_36 = arith.constant 3.200000e+01 : f32
    %81 = vector.broadcast %cst_36 : f32 to vector<8x1xf32>
    %82 = arith.divf %80, %81 : vector<8x1xf32>
    %83 = vector.broadcast %82 : vector<8x1xf32> to vector<8x32xf32>
    %84 = arith.subf %74, %83 : vector<8x32xf32>
    %85 = arith.mulf %84, %84 : vector<8x32xf32>
    %cst_37 = arith.constant dense<0.000000e+00> : vector<8xf32>
    %86 = vector.multi_reduction <add>, %85, %cst_37 [1] : vector<8x32xf32> to vector<8xf32>
    %87 = vector.shape_cast %86 : vector<8xf32> to vector<8x1xf32>
    %cst_38 = arith.constant 3.200000e+01 : f32
    %88 = vector.broadcast %cst_38 : f32 to vector<8x1xf32>
    %89 = arith.divf %87, %88 : vector<8x1xf32>
    %cst_39 = arith.constant 9.99999974E-6 : f32
    %90 = vector.broadcast %cst_39 : f32 to vector<8x1xf32>
    %91 = arith.addf %89, %90 : vector<8x1xf32>
    %92 = math.rsqrt %91 : vector<8x1xf32>
    %93 = vector.broadcast %92 : vector<8x1xf32> to vector<8x32xf32>
    %94 = arith.mulf %84, %93 : vector<8x32xf32>
    %95 = vector.broadcast %76 : vector<1x32xf32> to vector<8x32xf32>
    %96 = arith.mulf %94, %95 : vector<8x32xf32>
    %97 = vector.broadcast %78 : vector<1x32xf32> to vector<8x32xf32>
    %98 = arith.addf %96, %97 : vector<8x32xf32>
    %c0_40 = arith.constant 0 : index
    %c0_41 = arith.constant 0 : index
    %c0_42 = arith.constant 0 : index
    %99 = vector.load %arg9[%c0_40, %c0_41, %c0_42] : memref<2x32x64xf32, #tpu.memory_space<vmem>>, vector<1x32x64xf32>
    %100 = vector.shape_cast %99 : vector<1x32x64xf32> to vector<32x64xf32>
    %cst_43 = arith.constant dense<0.000000e+00> : vector<8x64xf32>
    %101 = tpu.matmul %98, %100, %cst_43 {dimension_numbers = #tpu.dot_dimension_numbers<[1], [0], [0], [1], [0, 0, 1, 1], [], []>} : vector<8x32xf32>, vector<32x64xf32>, vector<8x64xf32> -> vector<8x64xf32>
    %c0_44 = arith.constant 0 : index
    %c0_45 = arith.constant 0 : index
    %c0_46 = arith.constant 0 : index
    %102 = vector.load %arg10[%c0_44, %c0_45, %c0_46] : memref<2x1x64xf32, #tpu.memory_space<vmem>>, vector<1x1x64xf32>
    %103 = vector.shape_cast %102 : vector<1x1x64xf32> to vector<1x64xf32>
    %104 = vector.broadcast %103 : vector<1x64xf32> to vector<8x64xf32>
    %105 = arith.addf %101, %104 : vector<8x64xf32>
    %cst_47 = arith.constant 0.000000e+00 : f32
    %106 = vector.broadcast %cst_47 : f32 to vector<8x64xf32>
    %107 = arith.maximumf %105, %106 : vector<8x64xf32>
    %c0_48 = arith.constant 0 : index
    %c0_49 = arith.constant 0 : index
    %c0_50 = arith.constant 0 : index
    %108 = vector.load %arg11[%c0_48, %c0_49, %c0_50] : memref<2x64x32xf32, #tpu.memory_space<vmem>>, vector<1x64x32xf32>
    %109 = vector.shape_cast %108 : vector<1x64x32xf32> to vector<64x32xf32>
    %cst_51 = arith.constant dense<0.000000e+00> : vector<8x32xf32>
    %110 = tpu.matmul %107, %109, %cst_51 {dimension_numbers = #tpu.dot_dimension_numbers<[1], [0], [0], [1], [0, 0, 1, 1], [], []>} : vector<8x64xf32>, vector<64x32xf32>, vector<8x32xf32> -> vector<8x32xf32>
    %c0_52 = arith.constant 0 : index
    %c0_53 = arith.constant 0 : index
    %c0_54 = arith.constant 0 : index
    %111 = vector.load %arg12[%c0_52, %c0_53, %c0_54] : memref<2x1x32xf32, #tpu.memory_space<vmem>>, vector<1x1x32xf32>
    %112 = vector.shape_cast %111 : vector<1x1x32xf32> to vector<1x32xf32>
    %113 = vector.broadcast %112 : vector<1x32xf32> to vector<8x32xf32>
    %114 = arith.addf %110, %113 : vector<8x32xf32>
    %115 = arith.addf %98, %114 : vector<8x32xf32>
    %c0_55 = arith.constant 0 : index
    %c0_56 = arith.constant 0 : index
    %c0_57 = arith.constant 0 : index
    %116 = vector.load %arg13[%c0_55, %c0_56, %c0_57] : memref<2x1x32xf32, #tpu.memory_space<vmem>>, vector<1x1x32xf32>
    %117 = vector.shape_cast %116 : vector<1x1x32xf32> to vector<1x32xf32>
    %c0_58 = arith.constant 0 : index
    %c0_59 = arith.constant 0 : index
    %c0_60 = arith.constant 0 : index
    %118 = vector.load %arg14[%c0_58, %c0_59, %c0_60] : memref<2x1x32xf32, #tpu.memory_space<vmem>>, vector<1x1x32xf32>
    %119 = vector.shape_cast %118 : vector<1x1x32xf32> to vector<1x32xf32>
    %cst_61 = arith.constant dense<0.000000e+00> : vector<8xf32>
    %120 = vector.multi_reduction <add>, %115, %cst_61 [1] : vector<8x32xf32> to vector<8xf32>
    %121 = vector.shape_cast %120 : vector<8xf32> to vector<8x1xf32>
    %cst_62 = arith.constant 3.200000e+01 : f32
    %122 = vector.broadcast %cst_62 : f32 to vector<8x1xf32>
    %123 = arith.divf %121, %122 : vector<8x1xf32>
    %124 = vector.broadcast %123 : vector<8x1xf32> to vector<8x32xf32>
    %125 = arith.subf %115, %124 : vector<8x32xf32>
    %126 = arith.mulf %125, %125 : vector<8x32xf32>
    %cst_63 = arith.constant dense<0.000000e+00> : vector<8xf32>
    %127 = vector.multi_reduction <add>, %126, %cst_63 [1] : vector<8x32xf32> to vector<8xf32>
    %128 = vector.shape_cast %127 : vector<8xf32> to vector<8x1xf32>
    %cst_64 = arith.constant 3.200000e+01 : f32
    %129 = vector.broadcast %cst_64 : f32 to vector<8x1xf32>
    %130 = arith.divf %128, %129 : vector<8x1xf32>
    %cst_65 = arith.constant 9.99999974E-6 : f32
    %131 = vector.broadcast %cst_65 : f32 to vector<8x1xf32>
    %132 = arith.addf %130, %131 : vector<8x1xf32>
    %133 = math.rsqrt %132 : vector<8x1xf32>
    %134 = vector.broadcast %133 : vector<8x1xf32> to vector<8x32xf32>
    %135 = arith.mulf %125, %134 : vector<8x32xf32>
    %136 = vector.broadcast %117 : vector<1x32xf32> to vector<8x32xf32>
    %137 = arith.mulf %135, %136 : vector<8x32xf32>
    %138 = vector.broadcast %119 : vector<1x32xf32> to vector<8x32xf32>
    %139 = arith.addf %137, %138 : vector<8x32xf32>
    %c1 = arith.constant 1 : index
    %c0_66 = arith.constant 0 : index
    %c0_67 = arith.constant 0 : index
    %140 = vector.load %arg3[%c1, %c0_66, %c0_67] : memref<2x32x96xf32, #tpu.memory_space<vmem>>, vector<1x32x96xf32>
    %141 = vector.shape_cast %140 : vector<1x32x96xf32> to vector<32x96xf32>
    %cst_68 = arith.constant dense<0.000000e+00> : vector<8x96xf32>
    %142 = tpu.matmul %139, %141, %cst_68 {dimension_numbers = #tpu.dot_dimension_numbers<[1], [0], [0], [1], [0, 0, 1, 1], [], []>} : vector<8x32xf32>, vector<32x96xf32>, vector<8x96xf32> -> vector<8x96xf32>
    %c1_69 = arith.constant 1 : index
    %c0_70 = arith.constant 0 : index
    %c0_71 = arith.constant 0 : index
    %143 = vector.load %arg4[%c1_69, %c0_70, %c0_71] : memref<2x1x96xf32, #tpu.memory_space<vmem>>, vector<1x1x96xf32>
    %144 = vector.shape_cast %143 : vector<1x1x96xf32> to vector<1x96xf32>
    %145 = vector.broadcast %144 : vector<1x96xf32> to vector<8x96xf32>
    %146 = arith.addf %142, %145 : vector<8x96xf32>
    %147 = vector.shape_cast %146 : vector<8x96xf32> to vector<1x8x96xf32>
    %c1_72 = arith.constant 1 : index
    %c0_73 = arith.constant 0 : index
    %c0_74 = arith.constant 0 : index
    %148 = vector.load %arg5[%c1_72, %c0_73, %c0_74] : memref<2x32x32xf32, #tpu.memory_space<vmem>>, vector<1x32x32xf32>
    %149 = vector.shape_cast %148 : vector<1x32x32xf32> to vector<32x32xf32>
    %cst_75 = arith.constant 0.000000e+00 : f32
    %150 = vector.broadcast %cst_75 : f32 to vector<8x32xf32>
    %151 = vector.extract_strided_slice %147 {offsets = [0, 0, 0], sizes = [1, 8, 16], strides = [1, 1, 1]} : vector<1x8x96xf32> to vector<1x8x16xf32>
    %cst_76 = arith.constant 2.500000e-01 : f32
    %152 = vector.broadcast %cst_76 : f32 to vector<1x8x16xf32>
    %153 = arith.mulf %151, %152 : vector<1x8x16xf32>
    %154 = vector.extract_strided_slice %147 {offsets = [0, 0, 32], sizes = [1, 8, 16], strides = [1, 1, 1]} : vector<1x8x96xf32> to vector<1x8x16xf32>
    %155 = vector.extract_strided_slice %147 {offsets = [0, 0, 64], sizes = [1, 8, 16], strides = [1, 1, 1]} : vector<1x8x96xf32> to vector<1x8x16xf32>
    "tpu.trace_start"() <{level = 10 : i32, message = "bqd,bkd->bqk"}> : () -> ()
    %cst_77 = arith.constant dense<0.000000e+00> : vector<1x8x8xf32>
    %156 = tpu.matmul %153, %154, %cst_77 {dimension_numbers = #tpu.dot_dimension_numbers<[2], [2], [1], [1], [0, 0, 0, 1, 1, 1], [0], [0]>} : vector<1x8x16xf32>, vector<1x8x16xf32>, vector<1x8x8xf32> -> vector<1x8x8xf32>
    "tpu.trace_stop"() : () -> ()
    %157 = vector.broadcast %10 : vector<1x1x8xf32> to vector<1x8x8xf32>
    %158 = arith.addf %156, %157 : vector<1x8x8xf32>
    %cst_78 = arith.constant dense<0xFF800000> : vector<1x8xf32>
    %159 = vector.multi_reduction <maximumf>, %158, %cst_78 [2] : vector<1x8x8xf32> to vector<1x8xf32>
    %160 = vector.shape_cast %159 : vector<1x8xf32> to vector<1x8x1xf32>
    %161 = vector.broadcast %160 : vector<1x8x1xf32> to vector<1x8x8xf32>
    %162 = arith.subf %158, %161 : vector<1x8x8xf32>
    %163 = math.exp %162 : vector<1x8x8xf32>
    %cst_79 = arith.constant dense<0.000000e+00> : vector<1x8xf32>
    %164 = vector.multi_reduction <add>, %163, %cst_79 [2] : vector<1x8x8xf32> to vector<1x8xf32>
    %165 = vector.shape_cast %164 : vector<1x8xf32> to vector<1x8x1xf32>
    %166 = tpu.reciprocal %165 {approx = true} : vector<1x8x1xf32> -> vector<1x8x1xf32>
    %167 = vector.broadcast %166 : vector<1x8x1xf32> to vector<1x8x8xf32>
    %168 = arith.mulf %163, %167 : vector<1x8x8xf32>
    "tpu.trace_start"() <{level = 10 : i32, message = "bqk,bkd->bqd"}> : () -> ()
    %cst_80 = arith.constant dense<0.000000e+00> : vector<1x8x16xf32>
    %169 = tpu.matmul %168, %155, %cst_80 {dimension_numbers = #tpu.dot_dimension_numbers<[2], [1], [1], [2], [0, 0, 0, 1, 1, 2], [0], [0]>} : vector<1x8x8xf32>, vector<1x8x16xf32>, vector<1x8x16xf32> -> vector<1x8x16xf32>
    "tpu.trace_stop"() : () -> ()
    %170 = vector.shape_cast %169 : vector<1x8x16xf32> to vector<8x16xf32>
    %171 = vector.extract_strided_slice %149 {offsets = [0, 0], sizes = [16, 32], strides = [1, 1]} : vector<32x32xf32> to vector<16x32xf32>
    %cst_81 = arith.constant dense<0.000000e+00> : vector<8x32xf32>
    %172 = tpu.matmul %170, %171, %cst_81 {dimension_numbers = #tpu.dot_dimension_numbers<[1], [0], [0], [1], [0, 0, 1, 1], [], []>} : vector<8x16xf32>, vector<16x32xf32>, vector<8x32xf32> -> vector<8x32xf32>
    %173 = arith.addf %150, %172 : vector<8x32xf32>
    %174 = vector.extract_strided_slice %147 {offsets = [0, 0, 16], sizes = [1, 8, 16], strides = [1, 1, 1]} : vector<1x8x96xf32> to vector<1x8x16xf32>
    %cst_82 = arith.constant 2.500000e-01 : f32
    %175 = vector.broadcast %cst_82 : f32 to vector<1x8x16xf32>
    %176 = arith.mulf %174, %175 : vector<1x8x16xf32>
    %177 = vector.extract_strided_slice %147 {offsets = [0, 0, 48], sizes = [1, 8, 16], strides = [1, 1, 1]} : vector<1x8x96xf32> to vector<1x8x16xf32>
    %178 = vector.extract_strided_slice %147 {offsets = [0, 0, 80], sizes = [1, 8, 16], strides = [1, 1, 1]} : vector<1x8x96xf32> to vector<1x8x16xf32>
    "tpu.trace_start"() <{level = 10 : i32, message = "bqd,bkd->bqk"}> : () -> ()
    %cst_83 = arith.constant dense<0.000000e+00> : vector<1x8x8xf32>
    %179 = tpu.matmul %176, %177, %cst_83 {dimension_numbers = #tpu.dot_dimension_numbers<[2], [2], [1], [1], [0, 0, 0, 1, 1, 1], [0], [0]>} : vector<1x8x16xf32>, vector<1x8x16xf32>, vector<1x8x8xf32> -> vector<1x8x8xf32>
    "tpu.trace_stop"() : () -> ()
    %180 = vector.broadcast %10 : vector<1x1x8xf32> to vector<1x8x8xf32>
    %181 = arith.addf %179, %180 : vector<1x8x8xf32>
    %cst_84 = arith.constant dense<0xFF800000> : vector<1x8xf32>
    %182 = vector.multi_reduction <maximumf>, %181, %cst_84 [2] : vector<1x8x8xf32> to vector<1x8xf32>
    %183 = vector.shape_cast %182 : vector<1x8xf32> to vector<1x8x1xf32>
    %184 = vector.broadcast %183 : vector<1x8x1xf32> to vector<1x8x8xf32>
    %185 = arith.subf %181, %184 : vector<1x8x8xf32>
    %186 = math.exp %185 : vector<1x8x8xf32>
    %cst_85 = arith.constant dense<0.000000e+00> : vector<1x8xf32>
    %187 = vector.multi_reduction <add>, %186, %cst_85 [2] : vector<1x8x8xf32> to vector<1x8xf32>
    %188 = vector.shape_cast %187 : vector<1x8xf32> to vector<1x8x1xf32>
    %189 = tpu.reciprocal %188 {approx = true} : vector<1x8x1xf32> -> vector<1x8x1xf32>
    %190 = vector.broadcast %189 : vector<1x8x1xf32> to vector<1x8x8xf32>
    %191 = arith.mulf %186, %190 : vector<1x8x8xf32>
    "tpu.trace_start"() <{level = 10 : i32, message = "bqk,bkd->bqd"}> : () -> ()
    %cst_86 = arith.constant dense<0.000000e+00> : vector<1x8x16xf32>
    %192 = tpu.matmul %191, %178, %cst_86 {dimension_numbers = #tpu.dot_dimension_numbers<[2], [1], [1], [2], [0, 0, 0, 1, 1, 2], [0], [0]>} : vector<1x8x8xf32>, vector<1x8x16xf32>, vector<1x8x16xf32> -> vector<1x8x16xf32>
    "tpu.trace_stop"() : () -> ()
    %193 = vector.shape_cast %192 : vector<1x8x16xf32> to vector<8x16xf32>
    %194 = vector.extract_strided_slice %149 {offsets = [16, 0], sizes = [16, 32], strides = [1, 1]} : vector<32x32xf32> to vector<16x32xf32>
    %cst_87 = arith.constant dense<0.000000e+00> : vector<8x32xf32>
    %195 = tpu.matmul %193, %194, %cst_87 {dimension_numbers = #tpu.dot_dimension_numbers<[1], [0], [0], [1], [0, 0, 1, 1], [], []>} : vector<8x16xf32>, vector<16x32xf32>, vector<8x32xf32> -> vector<8x32xf32>
    %196 = arith.addf %173, %195 : vector<8x32xf32>
    %c1_88 = arith.constant 1 : index
    %c0_89 = arith.constant 0 : index
    %c0_90 = arith.constant 0 : index
    %197 = vector.load %arg6[%c1_88, %c0_89, %c0_90] : memref<2x1x32xf32, #tpu.memory_space<vmem>>, vector<1x1x32xf32>
    %198 = vector.shape_cast %197 : vector<1x1x32xf32> to vector<1x32xf32>
    %199 = vector.broadcast %198 : vector<1x32xf32> to vector<8x32xf32>
    %200 = arith.addf %196, %199 : vector<8x32xf32>
    %201 = arith.addf %139, %200 : vector<8x32xf32>
    %c1_91 = arith.constant 1 : index
    %c0_92 = arith.constant 0 : index
    %c0_93 = arith.constant 0 : index
    %202 = vector.load %arg7[%c1_91, %c0_92, %c0_93] : memref<2x1x32xf32, #tpu.memory_space<vmem>>, vector<1x1x32xf32>
    %203 = vector.shape_cast %202 : vector<1x1x32xf32> to vector<1x32xf32>
    %c1_94 = arith.constant 1 : index
    %c0_95 = arith.constant 0 : index
    %c0_96 = arith.constant 0 : index
    %204 = vector.load %arg8[%c1_94, %c0_95, %c0_96] : memref<2x1x32xf32, #tpu.memory_space<vmem>>, vector<1x1x32xf32>
    %205 = vector.shape_cast %204 : vector<1x1x32xf32> to vector<1x32xf32>
    %cst_97 = arith.constant dense<0.000000e+00> : vector<8xf32>
    %206 = vector.multi_reduction <add>, %201, %cst_97 [1] : vector<8x32xf32> to vector<8xf32>
    %207 = vector.shape_cast %206 : vector<8xf32> to vector<8x1xf32>
    %cst_98 = arith.constant 3.200000e+01 : f32
    %208 = vector.broadcast %cst_98 : f32 to vector<8x1xf32>
    %209 = arith.divf %207, %208 : vector<8x1xf32>
    %210 = vector.broadcast %209 : vector<8x1xf32> to vector<8x32xf32>
    %211 = arith.subf %201, %210 : vector<8x32xf32>
    %212 = arith.mulf %211, %211 : vector<8x32xf32>
    %cst_99 = arith.constant dense<0.000000e+00> : vector<8xf32>
    %213 = vector.multi_reduction <add>, %212, %cst_99 [1] : vector<8x32xf32> to vector<8xf32>
    %214 = vector.shape_cast %213 : vector<8xf32> to vector<8x1xf32>
    %cst_100 = arith.constant 3.200000e+01 : f32
    %215 = vector.broadcast %cst_100 : f32 to vector<8x1xf32>
    %216 = arith.divf %214, %215 : vector<8x1xf32>
    %cst_101 = arith.constant 9.99999974E-6 : f32
    %217 = vector.broadcast %cst_101 : f32 to vector<8x1xf32>
    %218 = arith.addf %216, %217 : vector<8x1xf32>
    %219 = math.rsqrt %218 : vector<8x1xf32>
    %220 = vector.broadcast %219 : vector<8x1xf32> to vector<8x32xf32>
    %221 = arith.mulf %211, %220 : vector<8x32xf32>
    %222 = vector.broadcast %203 : vector<1x32xf32> to vector<8x32xf32>
    %223 = arith.mulf %221, %222 : vector<8x32xf32>
    %224 = vector.broadcast %205 : vector<1x32xf32> to vector<8x32xf32>
    %225 = arith.addf %223, %224 : vector<8x32xf32>
    %c1_102 = arith.constant 1 : index
    %c0_103 = arith.constant 0 : index
    %c0_104 = arith.constant 0 : index
    %226 = vector.load %arg9[%c1_102, %c0_103, %c0_104] : memref<2x32x64xf32, #tpu.memory_space<vmem>>, vector<1x32x64xf32>
    %227 = vector.shape_cast %226 : vector<1x32x64xf32> to vector<32x64xf32>
    %cst_105 = arith.constant dense<0.000000e+00> : vector<8x64xf32>
    %228 = tpu.matmul %225, %227, %cst_105 {dimension_numbers = #tpu.dot_dimension_numbers<[1], [0], [0], [1], [0, 0, 1, 1], [], []>} : vector<8x32xf32>, vector<32x64xf32>, vector<8x64xf32> -> vector<8x64xf32>
    %c1_106 = arith.constant 1 : index
    %c0_107 = arith.constant 0 : index
    %c0_108 = arith.constant 0 : index
    %229 = vector.load %arg10[%c1_106, %c0_107, %c0_108] : memref<2x1x64xf32, #tpu.memory_space<vmem>>, vector<1x1x64xf32>
    %230 = vector.shape_cast %229 : vector<1x1x64xf32> to vector<1x64xf32>
    %231 = vector.broadcast %230 : vector<1x64xf32> to vector<8x64xf32>
    %232 = arith.addf %228, %231 : vector<8x64xf32>
    %cst_109 = arith.constant 0.000000e+00 : f32
    %233 = vector.broadcast %cst_109 : f32 to vector<8x64xf32>
    %234 = arith.maximumf %232, %233 : vector<8x64xf32>
    %c1_110 = arith.constant 1 : index
    %c0_111 = arith.constant 0 : index
    %c0_112 = arith.constant 0 : index
    %235 = vector.load %arg11[%c1_110, %c0_111, %c0_112] : memref<2x64x32xf32, #tpu.memory_space<vmem>>, vector<1x64x32xf32>
    %236 = vector.shape_cast %235 : vector<1x64x32xf32> to vector<64x32xf32>
    %cst_113 = arith.constant dense<0.000000e+00> : vector<8x32xf32>
    %237 = tpu.matmul %234, %236, %cst_113 {dimension_numbers = #tpu.dot_dimension_numbers<[1], [0], [0], [1], [0, 0, 1, 1], [], []>} : vector<8x64xf32>, vector<64x32xf32>, vector<8x32xf32> -> vector<8x32xf32>
    %c1_114 = arith.constant 1 : index
    %c0_115 = arith.constant 0 : index
    %c0_116 = arith.constant 0 : index
    %238 = vector.load %arg12[%c1_114, %c0_115, %c0_116] : memref<2x1x32xf32, #tpu.memory_space<vmem>>, vector<1x1x32xf32>
    %239 = vector.shape_cast %238 : vector<1x1x32xf32> to vector<1x32xf32>
    %240 = vector.broadcast %239 : vector<1x32xf32> to vector<8x32xf32>
    %241 = arith.addf %237, %240 : vector<8x32xf32>
    %242 = arith.addf %225, %241 : vector<8x32xf32>
    %c1_117 = arith.constant 1 : index
    %c0_118 = arith.constant 0 : index
    %c0_119 = arith.constant 0 : index
    %243 = vector.load %arg13[%c1_117, %c0_118, %c0_119] : memref<2x1x32xf32, #tpu.memory_space<vmem>>, vector<1x1x32xf32>
    %244 = vector.shape_cast %243 : vector<1x1x32xf32> to vector<1x32xf32>
    %c1_120 = arith.constant 1 : index
    %c0_121 = arith.constant 0 : index
    %c0_122 = arith.constant 0 : index
    %245 = vector.load %arg14[%c1_120, %c0_121, %c0_122] : memref<2x1x32xf32, #tpu.memory_space<vmem>>, vector<1x1x32xf32>
    %246 = vector.shape_cast %245 : vector<1x1x32xf32> to vector<1x32xf32>
    %cst_123 = arith.constant dense<0.000000e+00> : vector<8xf32>
    %247 = vector.multi_reduction <add>, %242, %cst_123 [1] : vector<8x32xf32> to vector<8xf32>
    %248 = vector.shape_cast %247 : vector<8xf32> to vector<8x1xf32>
    %cst_124 = arith.constant 3.200000e+01 : f32
    %249 = vector.broadcast %cst_124 : f32 to vector<8x1xf32>
    %250 = arith.divf %248, %249 : vector<8x1xf32>
    %251 = vector.broadcast %250 : vector<8x1xf32> to vector<8x32xf32>
    %252 = arith.subf %242, %251 : vector<8x32xf32>
    %253 = arith.mulf %252, %252 : vector<8x32xf32>
    %cst_125 = arith.constant dense<0.000000e+00> : vector<8xf32>
    %254 = vector.multi_reduction <add>, %253, %cst_125 [1] : vector<8x32xf32> to vector<8xf32>
    %255 = vector.shape_cast %254 : vector<8xf32> to vector<8x1xf32>
    %cst_126 = arith.constant 3.200000e+01 : f32
    %256 = vector.broadcast %cst_126 : f32 to vector<8x1xf32>
    %257 = arith.divf %255, %256 : vector<8x1xf32>
    %cst_127 = arith.constant 9.99999974E-6 : f32
    %258 = vector.broadcast %cst_127 : f32 to vector<8x1xf32>
    %259 = arith.addf %257, %258 : vector<8x1xf32>
    %260 = math.rsqrt %259 : vector<8x1xf32>
    %261 = vector.broadcast %260 : vector<8x1xf32> to vector<8x32xf32>
    %262 = arith.mulf %252, %261 : vector<8x32xf32>
    %263 = vector.broadcast %244 : vector<1x32xf32> to vector<8x32xf32>
    %264 = arith.mulf %262, %263 : vector<8x32xf32>
    %265 = vector.broadcast %246 : vector<1x32xf32> to vector<8x32xf32>
    %266 = arith.addf %264, %265 : vector<8x32xf32>
    %267 = vector.shape_cast %266 : vector<8x32xf32> to vector<1x8x32xf32>
    %c0_128 = arith.constant 0 : index
    %c0_129 = arith.constant 0 : index
    %268 = vector.load %arg15[%c0_128, %c0_129] : memref<1x32xf32, #tpu.memory_space<vmem>>, vector<1x32xf32>
    %269 = vector.shape_cast %268 : vector<1x32xf32> to vector<1x1x32xf32>
    %270 = vector.broadcast %269 : vector<1x1x32xf32> to vector<1x8x32xf32>
    %271 = arith.mulf %267, %270 : vector<1x8x32xf32>
    %cst_130 = arith.constant dense<0.000000e+00> : vector<1x8xf32>
    %272 = vector.multi_reduction <add>, %271, %cst_130 [2] : vector<1x8x32xf32> to vector<1x8xf32>
    %c0_131 = arith.constant 0 : index
    %c0_132 = arith.constant 0 : index
    %273 = vector.load %arg16[%c0_131, %c0_132] : memref<1x1xf32, #tpu.memory_space<vmem>>, vector<1x1xf32>
    %274 = vector.broadcast %273 : vector<1x1xf32> to vector<1x8xf32>
    %275 = arith.addf %272, %274 : vector<1x8xf32>
    %276 = vector.shape_cast %275 : vector<1x8xf32> to vector<1x1x8xf32>
    %c0_133 = arith.constant 0 : index
    %c0_134 = arith.constant 0 : index
    %c0_135 = arith.constant 0 : index
    %277 = vector.load %arg17[%c0_133, %c0_134, %c0_135] : memref<1x1x8xf32, #tpu.memory_space<vmem>>, vector<1x1x8xf32>
    tpu.vector_store %arg17[%c0_133, %c0_134, %c0_135], %276 {strides = array<i32>} : memref<1x1x8xf32, #tpu.memory_space<vmem>>, vector<1x1x8xf32>,
    return
  }
  func.func @transform_0(%arg0: i32, %arg1: memref<2xi32, #tpu.memory_space<smem>>) -> (i32, i32, i32) {
    %c0_i32 = arith.constant 0 : i32
    %c0_i32_0 = arith.constant 0 : i32
    %c0_i32_1 = arith.constant 0 : i32
    return %arg0, %c0_i32, %c0_i32_0 : i32, i32, i32
  }
  func.func @transform_1(%arg0: i32, %arg1: memref<2xi32, #tpu.memory_space<smem>>) -> (i32, i32, i32) {
    %c0_i32 = arith.constant 0 : i32
    %c0_i32_0 = arith.constant 0 : i32
    %c0_i32_1 = arith.constant 0 : i32
    %c0_i32_2 = arith.constant 0 : i32
    return %c0_i32, %c0_i32_0, %c0_i32_1 : i32, i32, i32
  }
  func.func @transform_2(%arg0: i32, %arg1: memref<2xi32, #tpu.memory_space<smem>>) -> (i32, i32, i32) {
    %c0_i32 = arith.constant 0 : i32
    %c0_i32_0 = arith.constant 0 : i32
    %c0_i32_1 = arith.constant 0 : i32
    %c0_i32_2 = arith.constant 0 : i32
    return %c0_i32, %c0_i32_0, %c0_i32_1 : i32, i32, i32
  }
  func.func @transform_3(%arg0: i32, %arg1: memref<2xi32, #tpu.memory_space<smem>>) -> (i32, i32, i32) {
    %c0_i32 = arith.constant 0 : i32
    %c0_i32_0 = arith.constant 0 : i32
    %c0_i32_1 = arith.constant 0 : i32
    %c0_i32_2 = arith.constant 0 : i32
    return %c0_i32, %c0_i32_0, %c0_i32_1 : i32, i32, i32
  }
  func.func @transform_4(%arg0: i32, %arg1: memref<2xi32, #tpu.memory_space<smem>>) -> (i32, i32, i32) {
    %c0_i32 = arith.constant 0 : i32
    %c0_i32_0 = arith.constant 0 : i32
    %c0_i32_1 = arith.constant 0 : i32
    %c0_i32_2 = arith.constant 0 : i32
    return %c0_i32, %c0_i32_0, %c0_i32_1 : i32, i32, i32
  }
  func.func @transform_5(%arg0: i32, %arg1: memref<2xi32, #tpu.memory_space<smem>>) -> (i32, i32, i32) {
    %c0_i32 = arith.constant 0 : i32
    %c0_i32_0 = arith.constant 0 : i32
    %c0_i32_1 = arith.constant 0 : i32
    %c0_i32_2 = arith.constant 0 : i32
    return %c0_i32, %c0_i32_0, %c0_i32_1 : i32, i32, i32
  }
  func.func @transform_6(%arg0: i32, %arg1: memref<2xi32, #tpu.memory_space<smem>>) -> (i32, i32, i32) {
    %c0_i32 = arith.constant 0 : i32
    %c0_i32_0 = arith.constant 0 : i32
    %c0_i32_1 = arith.constant 0 : i32
    %c0_i32_2 = arith.constant 0 : i32
    return %c0_i32, %c0_i32_0, %c0_i32_1 : i32, i32, i32
  }
  func.func @transform_7(%arg0: i32, %arg1: memref<2xi32, #tpu.memory_space<smem>>) -> (i32, i32, i32) {
    %c0_i32 = arith.constant 0 : i32
    %c0_i32_0 = arith.constant 0 : i32
    %c0_i32_1 = arith.constant 0 : i32
    %c0_i32_2 = arith.constant 0 : i32
    return %c0_i32, %c0_i32_0, %c0_i32_1 : i32, i32, i32
  }
  func.func @transform_8(%arg0: i32, %arg1: memref<2xi32, #tpu.memory_space<smem>>) -> (i32, i32, i32) {
    %c0_i32 = arith.constant 0 : i32
    %c0_i32_0 = arith.constant 0 : i32
    %c0_i32_1 = arith.constant 0 : i32
    %c0_i32_2 = arith.constant 0 : i32
    return %c0_i32, %c0_i32_0, %c0_i32_1 : i32, i32, i32
  }
  func.func @transform_9(%arg0: i32, %arg1: memref<2xi32, #tpu.memory_space<smem>>) -> (i32, i32, i32) {
    %c0_i32 = arith.constant 0 : i32
    %c0_i32_0 = arith.constant 0 : i32
    %c0_i32_1 = arith.constant 0 : i32
    %c0_i32_2 = arith.constant 0 : i32
    return %c0_i32, %c0_i32_0, %c0_i32_1 : i32, i32, i32
  }
  func.func @transform_10(%arg0: i32, %arg1: memref<2xi32, #tpu.memory_space<smem>>) -> (i32, i32, i32) {
    %c0_i32 = arith.constant 0 : i32
    %c0_i32_0 = arith.constant 0 : i32
    %c0_i32_1 = arith.constant 0 : i32
    %c0_i32_2 = arith.constant 0 : i32
    return %c0_i32, %c0_i32_0, %c0_i32_1 : i32, i32, i32
  }
  func.func @transform_11(%arg0: i32, %arg1: memref<2xi32, #tpu.memory_space<smem>>) -> (i32, i32, i32) {
    %c0_i32 = arith.constant 0 : i32
    %c0_i32_0 = arith.constant 0 : i32
    %c0_i32_1 = arith.constant 0 : i32
    %c0_i32_2 = arith.constant 0 : i32
    return %c0_i32, %c0_i32_0, %c0_i32_1 : i32, i32, i32
  }
  func.func @transform_12(%arg0: i32, %arg1: memref<2xi32, #tpu.memory_space<smem>>) -> (i32, i32, i32) {
    %c0_i32 = arith.constant 0 : i32
    %c0_i32_0 = arith.constant 0 : i32
    %c0_i32_1 = arith.constant 0 : i32
    %c0_i32_2 = arith.constant 0 : i32
    return %c0_i32, %c0_i32_0, %c0_i32_1 : i32, i32, i32
  }
  func.func @transform_13(%arg0: i32, %arg1: memref<2xi32, #tpu.memory_space<smem>>) -> (i32, i32) {
    %c0_i32 = arith.constant 0 : i32
    %c0_i32_0 = arith.constant 0 : i32
    %c0_i32_1 = arith.constant 0 : i32
    return %c0_i32, %c0_i32_0 : i32, i32
  }
  func.func @transform_14(%arg0: i32, %arg1: memref<2xi32, #tpu.memory_space<smem>>) -> (i32, i32) {
    %c0_i32 = arith.constant 0 : i32
    %c0_i32_0 = arith.constant 0 : i32
    %c0_i32_1 = arith.constant 0 : i32
    return %c0_i32, %c0_i32_0 : i32, i32
  }
  func.func @transform_15(%arg0: i32, %arg1: memref<2xi32, #tpu.memory_space<smem>>) -> (i32, i32, i32) {
    %c0_i32 = arith.constant 0 : i32
    %c0_i32_0 = arith.constant 0 : i32
    %c0_i32_1 = arith.constant 0 : i32
    return %arg0, %c0_i32, %c0_i32_0 : i32, i32, i32
  }
}

</mosaic_0001>

<llo_original>
// kernel: duration_predictor_forward.1
$region0: #{duration_predictor_forward.1}
  #allocation0 [shape = 'u32[]', space=smem, size = 0x4, offset = 0x4, fixed_abs, tag = 'smem constant byte address 0x4 - core index']
  #allocation1 [shape = 'u32[72,128]{1,0:T(1,128)}', space=vmem, size = 0x9000, scoped, tag = 'internal scratch']
  #allocation2 [shape = 's32[1]{0}', space=sflag, size = 0x4, scoped, tag = 'scoped memory for duration_predictor_forward.1']
  #allocation3 [shape = 'u8[512]{0}', space=smem, size = 0x200, scoped, tag = 'prefetched SMEM operand 0']
  #allocation4 [shape = 'f32[1,1]{1,0:T(1,128)S(1)}', space=vmem, size = 0x200, scoped, tag = 'scoped memory for duration_predictor_forward.1']
  %s0 = inlined_call_operand.vmem [shape: s32[2], index: 0, kind: input, shape index: {}]
  %s1 = inlined_call_operand.vmem [shape: f32[2,8,32], index: 1, kind: input, shape index: {}]
  %s2 = inlined_call_operand.vmem [shape: f32[2,32,96], index: 2, kind: input, shape index: {}]
  %s3 = inlined_call_operand.vmem [shape: f32[2,1,96], index: 3, kind: input, shape index: {}]
  %s4 = inlined_call_operand.vmem [shape: f32[2,32,32], index: 4, kind: input, shape index: {}]
  %s5 = inlined_call_operand.vmem [shape: f32[2,1,32], index: 5, kind: input, shape index: {}]
  %s6 = inlined_call_operand.vmem [shape: f32[2,1,32], index: 6, kind: input, shape index: {}]
  %s7 = inlined_call_operand.vmem [shape: f32[2,1,32], index: 7, kind: input, shape index: {}]
  %s8 = inlined_call_operand.vmem [shape: f32[2,32,64], index: 8, kind: input, shape index: {}]
  %s9 = inlined_call_operand.vmem [shape: f32[2,1,64], index: 9, kind: input, shape index: {}]
  %s10 = inlined_call_operand.vmem [shape: f32[2,64,32], index: 10, kind: input, shape index: {}]
  %s11 = inlined_call_operand.vmem [shape: f32[2,1,32], index: 11, kind: input, shape index: {}]
  %s12 = inlined_call_operand.vmem [shape: f32[2,1,32], index: 12, kind: input, shape index: {}]
  %s13 = inlined_call_operand.vmem [shape: f32[2,1,32], index: 13, kind: input, shape index: {}]
  %s14 = inlined_call_operand.vmem [shape: f32[1,32], index: 14, kind: input, shape index: {}]
  %s15 = inlined_call_operand.<no memory space> [shape: f32[1,1], index: 15, kind: input, shape index: {}]
  %s16 = inlined_call_operand.hbm [shape: f32[2,1,8], index: 16, kind: output, shape index: {}]
  %s17 = sld [smem:[#allocation0]]
  $region93: #{duration_predictor_forward.1} parent=0
    _
  %s19 = ssub.s32 1, %s17
  %s20 = scalar_select 0, %s19, %s17
  %s22 = sshll.u32 %s0, 4
  %s23 = int_to_ptr.vmem [resolvable:$true] %s22
  %25 = dma.vmem_to_smem %s23, 16, [#allocation3], [#allocation2]
  %v26 = vstv %s15
  %27 = vst [vmem:[#allocation4] sm:$0x1] %v26
  %29 = dma.done [#allocation2], 16
  %30 = sfence
  $region1: #{duration_predictor_forward.1} parent=0
    #allocation5 [shape = 'u8[1024]{0}', space=vmem, size = 0x400, scoped, tag = 'output window, operand 0']
    #allocation6 [shape = 's32[2]{0}', space=sflag, size = 0x8, scoped, tag = 'scoped memory for duration_predictor_forward.1']
    %31 = vsyncpa [#allocation6], 0
    %s32 = scalar_lea.sflag [#allocation6], 1
    %33 = vsyncpa %s32, 0
    loop: start=0, step=1, limit=4
    $region2: #{duration_predictor_forward.1} parent=1 // loop_pre_header
      _
    $region3: #{duration_predictor_forward.1} parent=1 // loop_header
      %s35 = sphi 0, %s39
      %p36 = scmp.ge.s32.totalorder %s35, 4
      %s45 = sphi 0, %s47
      %s48 = sphi 0, %s45
      %s49 = sphi 0, %s48
      %s65 = sphi 0, %s49
      %s69 = sphi 0, %s69
      %s71 = sphi 0, %s69
      %s72 = sphi 0, %s71
      %s86 = sphi 0, %s72
      %s90 = sphi 0, %s90
      %s92 = sphi 0, %s90
      %s93 = sphi 0, %s92
      %s107 = sphi 0, %s93
      %s111 = sphi 0, %s111
      %s113 = sphi 0, %s111
      %s114 = sphi 0, %s113
      %s128 = sphi 0, %s114
      %s132 = sphi 0, %s132
      %s134 = sphi 0, %s132
      %s135 = sphi 0, %s134
      %s149 = sphi 0, %s135
      %s153 = sphi 0, %s153
      %s155 = sphi 0, %s153
      %s156 = sphi 0, %s155
      %s170 = sphi 0, %s156
      %s174 = sphi 0, %s174
      %s176 = sphi 0, %s174
      %s177 = sphi 0, %s176
      %s191 = sphi 0, %s177
      %s195 = sphi 0, %s195
      %s197 = sphi 0, %s195
      %s198 = sphi 0, %s197
      %s212 = sphi 0, %s198
      %s216 = sphi 0, %s216
      %s218 = sphi 0, %s216
      %s219 = sphi 0, %s218
      %s233 = sphi 0, %s219
      %s237 = sphi 0, %s237
      %s239 = sphi 0, %s237
      %s240 = sphi 0, %s239
      %s254 = sphi 0, %s240
      %s258 = sphi 0, %s258
      %s260 = sphi 0, %s258
      %s261 = sphi 0, %s260
      %s275 = sphi 0, %s261
      %s279 = sphi 0, %s279
      %s281 = sphi 0, %s279
      %s282 = sphi 0, %s281
      %s296 = sphi 0, %s282
      %s300 = sphi 0, %s300
      %s302 = sphi 0, %s300
      %s303 = sphi 0, %s302
      %s317 = sphi 0, %s303
      %s321 = sphi 0, %s321
      %s323 = sphi 0, %s321
      %s324 = sphi 0, %s323
      %s338 = sphi 0, %s324
      %s342 = sphi 0, %s342
      %s344 = sphi 0, %s342
      %s345 = sphi 0, %s344
      %s359 = sphi 0, %s345
      %s365 = sphi 0, %s367
      %s368 = sphi 0, %s365
      %s369 = sphi 0, %s368
      %s385 = sphi 0, %s369
    $region4: #{duration_predictor_forward.1} parent=1 // loop_header_branch
      %38 = sbr.rel (%p36) target = $region8
    $region5: #{duration_predictor_forward.1} parent=1 // loop_body
      %s40 = ssub.s32 %s35, 1
      %s41 = ssub.s32 %s35, 2
      %s42 = sadd.s32 %s35, 1
      %s43 = ssub.s32 %s35, %s42
      %p44 = scmp.eq.s32.totalorder %s43, 0
      %s46 = sadd.s32 %s45, 1
      %s47 = scalar_select %p44, %s45, %s46
      %p50 = pneg %p44
      %p51 = scmp.eq.s32.totalorder %s35, 1
      %p52 = por %p50, %p51
      %p53 = scmp.ne.s32.totalorder %s45, %s48
      %p54 = scmp.eq.s32.totalorder %s35, 0
      %p55 = por %p53, %p54
      %p56 = scmp.ne.s32.totalorder %s45, %s48
      %p57 = scmp.eq.s32.totalorder %s40, 1
      %p58 = por %p56, %p57
      %p59 = scmp.ne.s32.totalorder %s48, %s49
      %p60 = scmp.eq.s32.totalorder %s40, 0
      %p61 = por %p59, %p60
      %p62 = scmp.ne.s32.totalorder %s48, %s49
      %p63 = scmp.eq.s32.totalorder %s41, 1
      %p64 = por %p62, %p63
      %p66 = scmp.ne.s32.totalorder %s49, %s65
      %p67 = scmp.eq.s32.totalorder %s41, 0
      %p68 = por %p66, %p67
      %s70 = sadd.s32 %s69, 1
      %p73 = scmp.eq.s32.totalorder %s35, 1
      %p74 = scmp.ne.s32.totalorder %s69, %s71
      %p75 = scmp.eq.s32.totalorder %s35, 0
      %p76 = por %p74, %p75
      %p77 = scmp.ne.s32.totalorder %s69, %s71
      %p78 = scmp.eq.s32.totalorder %s40, 1
      %p79 = por %p77, %p78
      %p80 = scmp.ne.s32.totalorder %s71, %s72
      %p81 = scmp.eq.s32.totalorder %s40, 0
      %p82 = por %p80, %p81
      %p83 = scmp.ne.s32.totalorder %s71, %s72
      %p84 = scmp.eq.s32.totalorder %s41, 1
      %p85 = por %p83, %p84
      %p87 = scmp.ne.s32.totalorder %s72, %s86
      %p88 = scmp.eq.s32.totalorder %s41, 0
      %p89 = por %p87, %p88
      %s91 = sadd.s32 %s90, 1
      %p94 = scmp.eq.s32.totalorder %s35, 1
      %p95 = scmp.ne.s32.totalorder %s90, %s92
      %p96 = scmp.eq.s32.totalorder %s35, 0
      %p97 = por %p95, %p96
      %p98 = scmp.ne.s32.totalorder %s90, %s92
      %p99 = scmp.eq.s32.totalorder %s40, 1
      %p100 = por %p98, %p99
      %p101 = scmp.ne.s32.totalorder %s92, %s93
      %p102 = scmp.eq.s32.totalorder %s40, 0
      %p103 = por %p101, %p102
      %p104 = scmp.ne.s32.totalorder %s92, %s93
      %p105 = scmp.eq.s32.totalorder %s41, 1
      %p106 = por %p104, %p105
      %p108 = scmp.ne.s32.totalorder %s93, %s107
      %p109 = scmp.eq.s32.totalorder %s41, 0
      %p110 = por %p108, %p109
      %s112 = sadd.s32 %s111, 1
      %p115 = scmp.eq.s32.totalorder %s35, 1
      %p116 = scmp.ne.s32.totalorder %s111, %s113
      %p117 = scmp.eq.s32.totalorder %s35, 0
      %p118 = por %p116, %p117
      %p119 = scmp.ne.s32.totalorder %s111, %s113
      %p120 = scmp.eq.s32.totalorder %s40, 1
      %p121 = por %p119, %p120
      %p122 = scmp.ne.s32.totalorder %s113, %s114
      %p123 = scmp.eq.s32.totalorder %s40, 0
      %p124 = por %p122, %p123
      %p125 = scmp.ne.s32.totalorder %s113, %s114
      %p126 = scmp.eq.s32.totalorder %s41, 1
      %p127 = por %p125, %p126
      %p129 = scmp.ne.s32.totalorder %s114, %s128
      %p130 = scmp.eq.s32.totalorder %s41, 0
      %p131 = por %p129, %p130
      %s133 = sadd.s32 %s132, 1
      %p136 = scmp.eq.s32.totalorder %s35, 1
      %p137 = scmp.ne.s32.totalorder %s132, %s134
      %p138 = scmp.eq.s32.totalorder %s35, 0
      %p139 = por %p137, %p138
      %p140 = scmp.ne.s32.totalorder %s132, %s134
      %p141 = scmp.eq.s32.totalorder %s40, 1
      %p142 = por %p140, %p141
      %p143 = scmp.ne.s32.totalorder %s134, %s135
      %p144 = scmp.eq.s32.totalorder %s40, 0
      %p145 = por %p143, %p144
      %p146 = scmp.ne.s32.totalorder %s134, %s135
      %p147 = scmp.eq.s32.totalorder %s41, 1
      %p148 = por %p146, %p147
      %p150 = scmp.ne.s32.totalorder %s135, %s149
      %p151 = scmp.eq.s32.totalorder %s41, 0
      %p152 = por %p150, %p151
      %s154 = sadd.s32 %s153, 1
      %p157 = scmp.eq.s32.totalorder %s35, 1
      %p158 = scmp.ne.s32.totalorder %s153, %s155
      %p159 = scmp.eq.s32.totalorder %s35, 0
      %p160 = por %p158, %p159
      %p161 = scmp.ne.s32.totalorder %s153, %s155
      %p162 = scmp.eq.s32.totalorder %s40, 1
      %p163 = por %p161, %p162
      %p164 = scmp.ne.s32.totalorder %s155, %s156
      %p165 = scmp.eq.s32.totalorder %s40, 0
      %p166 = por %p164, %p165
      %p167 = scmp.ne.s32.totalorder %s155, %s156
      %p168 = scmp.eq.s32.totalorder %s41, 1
      %p169 = por %p167, %p168
      %p171 = scmp.ne.s32.totalorder %s156, %s170
      %p172 = scmp.eq.s32.totalorder %s41, 0
      %p173 = por %p171, %p172
      %s175 = sadd.s32 %s174, 1
      %p178 = scmp.eq.s32.totalorder %s35, 1
      %p179 = scmp.ne.s32.totalorder %s174, %s176
      %p180 = scmp.eq.s32.totalorder %s35, 0
      %p181 = por %p179, %p180
      %p182 = scmp.ne.s32.totalorder %s174, %s176
      %p183 = scmp.eq.s32.totalorder %s40, 1
      %p184 = por %p182, %p183
      %p185 = scmp.ne.s32.totalorder %s176, %s177
      %p186 = scmp.eq.s32.totalorder %s40, 0
      %p187 = por %p185, %p186
      %p188 = scmp.ne.s32.totalorder %s176, %s177
      %p189 = scmp.eq.s32.totalorder %s41, 1
      %p190 = por %p188, %p189
      %p192 = scmp.ne.s32.totalorder %s177, %s191
      %p193 = scmp.eq.s32.totalorder %s41, 0
      %p194 = por %p192, %p193
      %s196 = sadd.s32 %s195, 1
      %p199 = scmp.eq.s32.totalorder %s35, 1
      %p200 = scmp.ne.s32.totalorder %s195, %s197
      %p201 = scmp.eq.s32.totalorder %s35, 0
      %p202 = por %p200, %p201
      %p203 = scmp.ne.s32.totalorder %s195, %s197
      %p204 = scmp.eq.s32.totalorder %s40, 1
      %p205 = por %p203, %p204
      %p206 = scmp.ne.s32.totalorder %s197, %s198
      %p207 = scmp.eq.s32.totalorder %s40, 0
      %p208 = por %p206, %p207
      %p209 = scmp.ne.s32.totalorder %s197, %s198
      %p210 = scmp.eq.s32.totalorder %s41, 1
      %p211 = por %p209, %p210
      %p213 = scmp.ne.s32.totalorder %s198, %s212
      %p214 = scmp.eq.s32.totalorder %s41, 0
      %p215 = por %p213, %p214
      %s217 = sadd.s32 %s216, 1
      %p220 = scmp.eq.s32.totalorder %s35, 1
      %p221 = scmp.ne.s32.totalorder %s216, %s218
      %p222 = scmp.eq.s32.totalorder %s35, 0
      %p223 = por %p221, %p222
      %p224 = scmp.ne.s32.totalorder %s216, %s218
      %p225 = scmp.eq.s32.totalorder %s40, 1
      %p226 = por %p224, %p225
      %p227 = scmp.ne.s32.totalorder %s218, %s219
      %p228 = scmp.eq.s32.totalorder %s40, 0
      %p229 = por %p227, %p228
      %p230 = scmp.ne.s32.totalorder %s218, %s219
      %p231 = scmp.eq.s32.totalorder %s41, 1
      %p232 = por %p230, %p231
      %p234 = scmp.ne.s32.totalorder %s219, %s233
      %p235 = scmp.eq.s32.totalorder %s41, 0
      %p236 = por %p234, %p235
      %s238 = sadd.s32 %s237, 1
      %p241 = scmp.eq.s32.totalorder %s35, 1
      %p242 = scmp.ne.s32.totalorder %s237, %s239
      %p243 = scmp.eq.s32.totalorder %s35, 0
      %p244 = por %p242, %p243
      %p245 = scmp.ne.s32.totalorder %s237, %s239
      %p246 = scmp.eq.s32.totalorder %s40, 1
      %p247 = por %p245, %p246
      %p248 = scmp.ne.s32.totalorder %s239, %s240
      %p249 = scmp.eq.s32.totalorder %s40, 0
      %p250 = por %p248, %p249
      %p251 = scmp.ne.s32.totalorder %s239, %s240
      %p252 = scmp.eq.s32.totalorder %s41, 1
      %p253 = por %p251, %p252
      %p255 = scmp.ne.s32.totalorder %s240, %s254
      %p256 = scmp.eq.s32.totalorder %s41, 0
      %p257 = por %p255, %p256
      %s259 = sadd.s32 %s258, 1
      %p262 = scmp.eq.s32.totalorder %s35, 1
      %p263 = scmp.ne.s32.totalorder %s258, %s260
      %p264 = scmp.eq.s32.totalorder %s35, 0
      %p265 = por %p263, %p264
      %p266 = scmp.ne.s32.totalorder %s258, %s260
      %p267 = scmp.eq.s32.totalorder %s40, 1
      %p268 = por %p266, %p267
      %p269 = scmp.ne.s32.totalorder %s260, %s261
      %p270 = scmp.eq.s32.totalorder %s40, 0
      %p271 = por %p269, %p270
      %p272 = scmp.ne.s32.totalorder %s260, %s261
      %p273 = scmp.eq.s32.totalorder %s41, 1
      %p274 = por %p272, %p273
      %p276 = scmp.ne.s32.totalorder %s261, %s275
      %p277 = scmp.eq.s32.totalorder %s41, 0
      %p278 = por %p276, %p277
      %s280 = sadd.s32 %s279, 1
      %p283 = scmp.eq.s32.totalorder %s35, 1
      %p284 = scmp.ne.s32.totalorder %s279, %s281
      %p285 = scmp.eq.s32.totalorder %s35, 0
      %p286 = por %p284, %p285
      %p287 = scmp.ne.s32.totalorder %s279, %s281
      %p288 = scmp.eq.s32.totalorder %s40, 1
      %p289 = por %p287, %p288
      %p290 = scmp.ne.s32.totalorder %s281, %s282
      %p291 = scmp.eq.s32.totalorder %s40, 0
      %p292 = por %p290, %p291
      %p293 = scmp.ne.s32.totalorder %s281, %s282
      %p294 = scmp.eq.s32.totalorder %s41, 1
      %p295 = por %p293, %p294
      %p297 = scmp.ne.s32.totalorder %s282, %s296
      %p298 = scmp.eq.s32.totalorder %s41, 0
      %p299 = por %p297, %p298
      %s301 = sadd.s32 %s300, 1
      %p304 = scmp.eq.s32.totalorder %s35, 1
      %p305 = scmp.ne.s32.totalorder %s300, %s302
      %p306 = scmp.eq.s32.totalorder %s35, 0
      %p307 = por %p305, %p306
      %p308 = scmp.ne.s32.totalorder %s300, %s302
      %p309 = scmp.eq.s32.totalorder %s40, 1
      %p310 = por %p308, %p309
      %p311 = scmp.ne.s32.totalorder %s302, %s303
      %p312 = scmp.eq.s32.totalorder %s40, 0
      %p313 = por %p311, %p312
      %p314 = scmp.ne.s32.totalorder %s302, %s303
      %p315 = scmp.eq.s32.totalorder %s41, 1
      %p316 = por %p314, %p315
      %p318 = scmp.ne.s32.totalorder %s303, %s317
      %p319 = scmp.eq.s32.totalorder %s41, 0
      %p320 = por %p318, %p319
      %s322 = sadd.s32 %s321, 1
      %p325 = scmp.eq.s32.totalorder %s35, 1
      %p326 = scmp.ne.s32.totalorder %s321, %s323
      %p327 = scmp.eq.s32.totalorder %s35, 0
      %p328 = por %p326, %p327
      %p329 = scmp.ne.s32.totalorder %s321, %s323
      %p330 = scmp.eq.s32.totalorder %s40, 1
      %p331 = por %p329, %p330
      %p332 = scmp.ne.s32.totalorder %s323, %s324
      %p333 = scmp.eq.s32.totalorder %s40, 0
      %p334 = por %p332, %p333
      %p335 = scmp.ne.s32.totalorder %s323, %s324
      %p336 = scmp.eq.s32.totalorder %s41, 1
      %p337 = por %p335, %p336
      %p339 = scmp.ne.s32.totalorder %s324, %s338
      %p340 = scmp.eq.s32.totalorder %s41, 0
      %p341 = por %p339, %p340
      %s343 = sadd.s32 %s342, 1
      %p346 = scmp.eq.s32.totalorder %s35, 1
      %p347 = scmp.ne.s32.totalorder %s342, %s344
      %p348 = scmp.eq.s32.totalorder %s35, 0
      %p349 = por %p347, %p348
      %p350 = scmp.ne.s32.totalorder %s342, %s344
      %p351 = scmp.eq.s32.totalorder %s40, 1
      %p352 = por %p350, %p351
      %p353 = scmp.ne.s32.totalorder %s344, %s345
      %p354 = scmp.eq.s32.totalorder %s40, 0
      %p355 = por %p353, %p354
      %p356 = scmp.ne.s32.totalorder %s344, %s345
      %p357 = scmp.eq.s32.totalorder %s41, 1
      %p358 = por %p356, %p357
      %p360 = scmp.ne.s32.totalorder %s345, %s359
      %p361 = scmp.eq.s32.totalorder %s41, 0
      %p362 = por %p360, %p361
      %s363 = ssub.s32 %s35, %s42
      %p364 = scmp.eq.s32.totalorder %s363, 0
      %s366 = sadd.s32 %s365, 1
      %s367 = scalar_select %p364, %s365, %s366
      %p370 = pneg %p364
      %p371 = scmp.eq.s32.totalorder %s35, 1
      %p372 = por %p370, %p371
      %p373 = scmp.ne.s32.totalorder %s365, %s368
      %p374 = scmp.eq.s32.totalorder %s35, 0
      %p375 = por %p373, %p374
      %p376 = scmp.ne.s32.totalorder %s365, %s368
      %p377 = scmp.eq.s32.totalorder %s40, 1
      %p378 = por %p376, %p377
      %p379 = scmp.ne.s32.totalorder %s368, %s369
      %p380 = scmp.eq.s32.totalorder %s40, 0
      %p381 = por %p379, %p380
      %p382 = scmp.ne.s32.totalorder %s368, %s369
      %p383 = scmp.eq.s32.totalorder %s41, 1
      %p384 = por %p382, %p383
      %p386 = scmp.ne.s32.totalorder %s369, %s385
      %p387 = scmp.eq.s32.totalorder %s41, 0
      %p388 = por %p386, %p387
      %p389 = scmp.le.s32.totalorder 1, %s35
      %p390 = scmp.lt.s32.totalorder %s35, 3
      %p391 = pnand %p389, %p390
      %p392 = pneg %p391
      // Predicated region
      $region9: #{duration_predictor_forward.1} parent=5 // pred_check
        _
      $region10: #{duration_predictor_forward.1} parent=5 // pred_check_branch
        %394 = sbr.rel (%p391) target = $region12
      $region11: #{duration_predictor_forward.1} parent=5 // pred_region
        %s395 = ssub.s32 %s35, 1
        // Predicated region
        $region13: #{duration_predictor_forward.1} parent=11 // pred_check
          %p396 = pneg %p82
        $region14: #{duration_predictor_forward.1} parent=11 // pred_check_branch
          %398 = sbr.rel (%p396) target = $region16
        $region15: #{duration_predictor_forward.1} parent=11 // pred_region
          _
        $region16: #{duration_predictor_forward.1} parent=11 // pred_fallthru
          _
        // Predicated region
        $region17: #{duration_predictor_forward.1} parent=11 // pred_check
          %p399 = pneg %p103
        $region18: #{duration_predictor_forward.1} parent=11 // pred_check_branch
          %401 = sbr.rel (%p399) target = $region20
        $region19: #{duration_predictor_forward.1} parent=11 // pred_region
          _
        $region20: #{duration_predictor_forward.1} parent=11 // pred_fallthru
          _
        // Predicated region
        $region21: #{duration_predictor_forward.1} parent=11 // pred_check
          %p402 = pneg %p124
        $region22: #{duration_predictor_forward.1} parent=11 // pred_check_branch
          %404 = sbr.rel (%p402) target = $region24
        $region23: #{duration_predictor_forward.1} parent=11 // pred_region
          _
        $region24: #{duration_predictor_forward.1} parent=11 // pred_fallthru
          _
        // Predicated region
        $region25: #{duration_predictor_forward.1} parent=11 // pred_check
          %p405 = pneg %p145
        $region26: #{duration_predictor_forward.1} parent=11 // pred_check_branch
          %407 = sbr.rel (%p405) target = $region28
        $region27: #{duration_predictor_forward.1} parent=11 // pred_region
          _
        $region28: #{duration_predictor_forward.1} parent=11 // pred_fallthru
          _
        // Predicated region
        $region29: #{duration_predictor_forward.1} parent=11 // pred_check
          %p408 = pneg %p166
        $region30: #{duration_predictor_forward.1} parent=11 // pred_check_branch
          %410 = sbr.rel (%p408) target = $region32
        $region31: #{duration_predictor_forward.1} parent=11 // pred_region
          _
        $region32: #{duration_predictor_forward.1} parent=11 // pred_fallthru
          _
        // Predicated region
        $region33: #{duration_predictor_forward.1} parent=11 // pred_check
          %p411 = pneg %p187
        $region34: #{duration_predictor_forward.1} parent=11 // pred_check_branch
          %413 = sbr.rel (%p411) target = $region36
        $region35: #{duration_predictor_forward.1} parent=11 // pred_region
          _
        $region36: #{duration_predictor_forward.1} parent=11 // pred_fallthru
          _
        // Predicated region
        $region37: #{duration_predictor_forward.1} parent=11 // pred_check
          %p414 = pneg %p208
        $region38: #{duration_predictor_forward.1} parent=11 // pred_check_branch
          %416 = sbr.rel (%p414) target = $region40
        $region39: #{duration_predictor_forward.1} parent=11 // pred_region
          _
        $region40: #{duration_predictor_forward.1} parent=11 // pred_fallthru
          _
        // Predicated region
        $region41: #{duration_predictor_forward.1} parent=11 // pred_check
          %p417 = pneg %p229
        $region42: #{duration_predictor_forward.1} parent=11 // pred_check_branch
          %419 = sbr.rel (%p417) target = $region44
        $region43: #{duration_predictor_forward.1} parent=11 // pred_region
          _
        $region44: #{duration_predictor_forward.1} parent=11 // pred_fallthru
          _
        // Predicated region
        $region45: #{duration_predictor_forward.1} parent=11 // pred_check
          %p420 = pneg %p250
        $region46: #{duration_predictor_forward.1} parent=11 // pred_check_branch
          %422 = sbr.rel (%p420) target = $region48
        $region47: #{duration_predictor_forward.1} parent=11 // pred_region
          _
        $region48: #{duration_predictor_forward.1} parent=11 // pred_fallthru
          _
        // Predicated region
        $region49: #{duration_predictor_forward.1} parent=11 // pred_check
          %p423 = pneg %p271
        $region50: #{duration_predictor_forward.1} parent=11 // pred_check_branch
          %425 = sbr.rel (%p423) target = $region52
        $region51: #{duration_predictor_forward.1} parent=11 // pred_region
          _
        $region52: #{duration_predictor_forward.1} parent=11 // pred_fallthru
          _
        // Predicated region
        $region53: #{duration_predictor_forward.1} parent=11 // pred_check
          %p426 = pneg %p292
        $region54: #{duration_predictor_forward.1} parent=11 // pred_check_branch
          %428 = sbr.rel (%p426) target = $region56
        $region55: #{duration_predictor_forward.1} parent=11 // pred_region
          _
        $region56: #{duration_predictor_forward.1} parent=11 // pred_fallthru
          _
        // Predicated region
        $region57: #{duration_predictor_forward.1} parent=11 // pred_check
          %p429 = pneg %p313
        $region58: #{duration_predictor_forward.1} parent=11 // pred_check_branch
          %431 = sbr.rel (%p429) target = $region60
        $region59: #{duration_predictor_forward.1} parent=11 // pred_region
          _
        $region60: #{duration_predictor_forward.1} parent=11 // pred_fallthru
          _
        // Predicated region
        $region61: #{duration_predictor_forward.1} parent=11 // pred_check
          %p432 = pneg %p334
        $region62: #{duration_predictor_forward.1} parent=11 // pred_check_branch
          %434 = sbr.rel (%p432) target = $region64
        $region63: #{duration_predictor_forward.1} parent=11 // pred_region
          _
        $region64: #{duration_predictor_forward.1} parent=11 // pred_fallthru
          _
        // Predicated region
        $region65: #{duration_predictor_forward.1} parent=11 // pred_check
          %p435 = pneg %p355
        $region66: #{duration_predictor_forward.1} parent=11 // pred_check_branch
          %437 = sbr.rel (%p435) target = $region68
        $region67: #{duration_predictor_forward.1} parent=11 // pred_region
          _
        $region68: #{duration_predictor_forward.1} parent=11 // pred_fallthru
          _
      $region12: #{duration_predictor_forward.1} parent=5 // pred_fallthru
        _
      %p438 = scmp.lt.s32.totalorder %s35, 2
      // Predicated region
      $region69: #{duration_predictor_forward.1} parent=5 // pred_check
        %p439 = pneg %p438
      $region70: #{duration_predictor_forward.1} parent=5 // pred_check_branch
        %441 = sbr.rel (%p439) target = $region72
      $region71: #{duration_predictor_forward.1} parent=5 // pred_region
        // Predicated region
        $region73: #{duration_predictor_forward.1} parent=71 // pred_check
          %p442 = pneg %p55
        $region74: #{duration_predictor_forward.1} parent=71 // pred_check_branch
          %444 = sbr.rel (%p442) target = $region76
        $region75: #{duration_predictor_forward.1} parent=71 // pred_region
          %p445 = scmp.lt.s32.totalorder %s35, 1
          %s446 = scalar_select %p445, %s35, 1
          %s447 = smul.addr %s446, 8
          %s448 = scalar_lea.vmem %s1, %s447
        $region76: #{duration_predictor_forward.1} parent=71 // pred_fallthru
          _
      $region72: #{duration_predictor_forward.1} parent=5 // pred_fallthru
        _
      %p449 = scmp.le.s32.totalorder 1, %s35
      %p450 = scmp.lt.s32.totalorder %s35, 3
      %p451 = pnand %p449, %p450
      %p452 = pneg %p451
      // Predicated region
      $region77: #{duration_predictor_forward.1} parent=5 // pred_check
        _
      $region78: #{duration_predictor_forward.1} parent=5 // pred_check_branch
        %454 = sbr.rel (%p451) target = $region80
      $region79: #{duration_predictor_forward.1} parent=5 // pred_region
        %s455 = ssub.s32 %s35, 1
        %p456 = scmp.lt.s32.totalorder %s40, 1
        %s457 = scalar_select %p456, %s40, 1
        %s458 = smul.addr %s457, 8
        %s459 = scalar_lea.vmem %s1, %s458
        %p460 = pneg %p61
        %p461 = pneg %p58
        %p462 = pneg %p82
        %p463 = pneg %p79
        %p464 = pneg %p103
        %p465 = pneg %p100
        %p466 = pneg %p124
        %p467 = pneg %p121
        %p468 = pneg %p145
        %p469 = pneg %p142
        %p470 = pneg %p166
        %p471 = pneg %p163
        %p472 = pneg %p187
        %p473 = pneg %p184
        %p474 = pneg %p208
        %p475 = pneg %p205
        %p476 = pneg %p229
        %p477 = pneg %p226
        %p478 = pneg %p250
        %p479 = pneg %p247
        %p480 = pneg %p271
        %p481 = pneg %p268
        %p482 = pneg %p292
        %p483 = pneg %p289
        %p484 = pneg %p313
        %p485 = pneg %p310
        %p486 = pneg %p334
        %p487 = pneg %p331
        %p488 = pneg %p355
        %p489 = pneg %p352
        %p490 = pneg %p381
        %p491 = pneg %p378
        %s492 = sand.u32 %s368, 1
        %s493 = scalar_lea.sflag [#allocation6], %s492
        %s494 = sand.u32 %s368, 1
        %s495 = scalar_lea.vmem [#allocation5], %s494
        %p496 = scmp.lt.s32.totalorder %s40, 1
        %s497 = scalar_select %p496, %s40, 1
        %s498 = smul.addr %s497, 8
        %s499 = scalar_lea.vmem %s1, %s498
        %v500 = vlaneseq
        %v501 = vand.u32 %v500, 127
        %s502 = sld [smem:[#allocation3 + %s40]]
        %v503 = vstv %s502
        %vm504 = vcmp.ge.s32.totalorder %v501, %v503
        %v505 = vsel %vm504, -1e+09, 0.0
        %v506 = vld [vmem:[%s499] sm:$0xff]
        %v507 = vld [vmem:[%s2] sm:$0xff]
        %v508 = vld [vmem:[%s2 + $0x8] sm:$0xff]
        %v509 = vld [vmem:[%s2 + $0x10] sm:$0xff]
        %v510 = vld [vmem:[%s2 + $0x18] sm:$0xff]
        %v511 = vld [vmem:[%s3] sm:$0x1]
        %v513 = vperm.slane %v511, 0
        %vm515 = vcmask 261120
        %v517 = vsel %vm515, %v506, 0
        %519 = vmatpush.msra.mxu0 0.0
        %520 = vmatpush.msra.mxu0 0.0
        %521 = vmatpush.msra.mxu0 0.0
        %522 = vmatpush.msra.mxu0 0.0
        %523 = vmatpush.msra.mxu0 0.0
        %524 = vmatpush.msra.mxu0 0.0
        %525 = vmatpush.msra.mxu0 0.0
        %526 = vmatpush.msra.mxu0 0.0
        %527 = vmatpush.msra.mxu0 0.0
        %528 = vmatpush.msra.mxu0 0.0
        %529 = vmatpush.msra.mxu0 0.0
        %530 = vmatpush.msra.mxu0 0.0
        %531 = vmatpush.msra.mxu0 %v510
        %532 = vmatpush.msra.mxu0 %v509
        %533 = vmatpush.msra.mxu0 %v508
        %534 = vmatpush.msra.mxu0 %v507
        %535 = vmatmul.f32.gmra.mxu0 %v517
        %v536 = vpop.f32.mrf.mxu0
        %v537 = vadd.f32 %v513, %v536
        %538 = vdwg.mxu0
        %v539 = vld [vmem:[%s4] sm:$0xff]
        %v540 = vld [vmem:[%s4 + $0x8] sm:$0xff]
        %v541 = vld [vmem:[%s4 + $0x10] sm:$0xff]
        %v542 = vld [vmem:[%s4 + $0x18] sm:$0xff]
        %v543 = vmul.f32 %v537, 0.25
        %545 = vrot.lane.b32.xlu0 %v537, 96
        %v546 = vpop.permute.xlu0 %545
        %vm547 = vcmask 130048
        %v549 = vsel %vm547, %v543, 0
        %v551 = vsel %vm547, %v546, 0
        %553 = vmatpush.xpose.msra.mxu0 0.0
        %554 = vmatpush.xpose.msra.mxu0 0.0
        %555 = vmatpush.xpose.msra.mxu0 0.0
        %556 = vmatpush.xpose.msra.mxu0 0.0
        %557 = vmatpush.xpose.msra.mxu0 0.0
        %558 = vmatpush.xpose.msra.mxu0 0.0
        %559 = vmatpush.xpose.msra.mxu0 0.0
        %560 = vmatpush.xpose.msra.mxu0 0.0
        %561 = vmatpush.xpose.msra.mxu0 0.0
        %562 = vmatpush.xpose.msra.mxu0 0.0
        %563 = vmatpush.xpose.msra.mxu0 0.0
        %564 = vmatpush.xpose.msra.mxu0 0.0
        %565 = vmatpush.xpose.msra.mxu0 0.0
        %566 = vmatpush.xpose.msra.mxu0 0.0
        %567 = vmatpush.xpose.msra.mxu0 0.0
        %568 = vmatpush.xpose.msra.mxu0 %v551
        %569 = vmatmul.f32.gmra.mxu0 %v549
        %v570 = vpop.f32.mrf.mxu0
        %v571 = vadd.f32 %v505, %v570
        %572 = vdwg.mxu0
        %vm573 = vcmask 64512
        %v574 = vsel %vm573, %v571, -inf
        %575 = vmax.xlane.f32.xlu0 %v574
        %v576 = vpop.xlane.xlu0 %575
        %v577 = vsub.f32 %v571, %v576
        %v578 = vmul.f32 %v577, 1.442695
        %v579 = vpow.pop %v578
        %v580 = vsel %vm573, %v579, 0.0
        %581 = vadd.xlane.f32.xlu0 %v580
        %v582 = vpop.xlane.xlu0 %581
        %v583 = vrcp.pop %v582
        %v584 = vmul.f32 %v579, %v583
        %585 = vrot.lane.b32.xlu0 %v537, 64
        %v586 = vpop.permute.xlu0 %585
        %v589 = vsel %vm573, %v584, 0
        %591 = vmatpush.msra.mxu0 0.0
        %592 = vmatpush.msra.mxu0 0.0
        %593 = vmatpush.msra.mxu0 0.0
        %594 = vmatpush.msra.mxu0 0.0
        %595 = vmatpush.msra.mxu0 0.0
        %596 = vmatpush.msra.mxu0 0.0
        %597 = vmatpush.msra.mxu0 0.0
        %598 = vmatpush.msra.mxu0 0.0
        %599 = vmatpush.msra.mxu0 0.0
        %600 = vmatpush.msra.mxu0 0.0
        %601 = vmatpush.msra.mxu0 0.0
        %602 = vmatpush.msra.mxu0 0.0
        %603 = vmatpush.msra.mxu0 0.0
        %604 = vmatpush.msra.mxu0 0.0
        %605 = vmatpush.msra.mxu0 0.0
        %606 = vmatpush.msra.mxu0 %v586
        %607 = vmatmul.f32.gmra.mxu0 %v589
        %v608 = vpop.f32.mrf.mxu0
        %v609 = vadd.f32 0.0, %v608
        %610 = vdwg.mxu0
        %611 = vrot.lane.b32.xlu0 %v543, 112
        %v612 = vpop.permute.xlu0 %611
        %613 = vrot.lane.b32.xlu0 %v537, 80
        %v614 = vpop.permute.xlu0 %613
        %v615 = vsel %vm547, %v612, 0
        %v617 = vsel %vm547, %v614, 0
        %619 = vmatpush.xpose.msra.mxu0 0.0
        %620 = vmatpush.xpose.msra.mxu0 0.0
        %621 = vmatpush.xpose.msra.mxu0 0.0
        %622 = vmatpush.xpose.msra.mxu0 0.0
        %623 = vmatpush.xpose.msra.mxu0 0.0
        %624 = vmatpush.xpose.msra.mxu0 0.0
        %625 = vmatpush.xpose.msra.mxu0 0.0
        %626 = vmatpush.xpose.msra.mxu0 0.0
        %627 = vmatpush.xpose.msra.mxu0 0.0
        %628 = vmatpush.xpose.msra.mxu0 0.0
        %629 = vmatpush.xpose.msra.mxu0 0.0
        %630 = vmatpush.xpose.msra.mxu0 0.0
        %631 = vmatpush.xpose.msra.mxu0 0.0
        %632 = vmatpush.xpose.msra.mxu0 0.0
        %633 = vmatpush.xpose.msra.mxu0 0.0
        %634 = vmatpush.xpose.msra.mxu0 %v617
        %635 = vmatmul.f32.gmra.mxu0 %v615
        %v636 = vpop.f32.mrf.mxu0
        %v637 = vadd.f32 %v505, %v636
        %638 = vdwg.mxu0
        %v639 = vsel %vm573, %v637, -inf
        %640 = vmax.xlane.f32.xlu0 %v639
        %v641 = vpop.xlane.xlu0 %640
        %v642 = vsub.f32 %v637, %v641
        %v643 = vmul.f32 %v642, 1.442695
        %v644 = vpow.pop %v643
        %v645 = vsel %vm573, %v644, 0.0
        %646 = vadd.xlane.f32.xlu0 %v645
        %v647 = vpop.xlane.xlu0 %646
        %v648 = vrcp.pop %v647
        %v649 = vmul.f32 %v644, %v648
        %650 = vrot.lane.b32.xlu0 %v537, 48
        %v651 = vpop.permute.xlu0 %650
        %v654 = vsel %vm573, %v649, 0
        %656 = vmatpush.msra.mxu0 0.0
        %657 = vmatpush.msra.mxu0 0.0
        %658 = vmatpush.msra.mxu0 0.0
        %659 = vmatpush.msra.mxu0 0.0
        %660 = vmatpush.msra.mxu0 0.0
        %661 = vmatpush.msra.mxu0 0.0
        %662 = vmatpush.msra.mxu0 0.0
        %663 = vmatpush.msra.mxu0 0.0
        %664 = vmatpush.msra.mxu0 0.0
        %665 = vmatpush.msra.mxu0 0.0
        %666 = vmatpush.msra.mxu0 0.0
        %667 = vmatpush.msra.mxu0 0.0
        %668 = vmatpush.msra.mxu0 0.0
        %669 = vmatpush.msra.mxu0 0.0
        %670 = vmatpush.msra.mxu0 0.0
        %671 = vmatpush.msra.mxu0 %v651
        %672 = vmatmul.f32.gmra.mxu0 %v654
        %v673 = vpop.f32.mrf.mxu0
        %v674 = vadd.f32 0.0, %v673
        %675 = vdwg.mxu0
        %v677 = vsel %vm547, %v674, 0
        %679 = vmatpush.msra.mxu0 0.0
        %680 = vmatpush.msra.mxu0 0.0
        %681 = vmatpush.msra.mxu0 0.0
        %682 = vmatpush.msra.mxu0 0.0
        %683 = vmatpush.msra.mxu0 0.0
        %684 = vmatpush.msra.mxu0 0.0
        %685 = vmatpush.msra.mxu0 0.0
        %686 = vmatpush.msra.mxu0 0.0
        %687 = vmatpush.msra.mxu0 0.0
        %688 = vmatpush.msra.mxu0 0.0
        %689 = vmatpush.msra.mxu0 0.0
        %690 = vmatpush.msra.mxu0 0.0
        %691 = vmatpush.msra.mxu0 0.0
        %692 = vmatpush.msra.mxu0 0.0
        %693 = vmatpush.msra.mxu0 %v542
        %694 = vmatpush.msra.mxu0 %v541
        %695 = vmatmul.f32.gmra.mxu0 %v677
        %v696 = vpop.f32.mrf.mxu0
        %v697 = vadd.f32 0.0, %v696
        %698 = vdwg.mxu0
        %v700 = vsel %vm547, %v609, 0
        %702 = vmatpush.msra.mxu0 0.0
        %703 = vmatpush.msra.mxu0 0.0
        %704 = vmatpush.msra.mxu0 0.0
        %705 = vmatpush.msra.mxu0 0.0
        %706 = vmatpush.msra.mxu0 0.0
        %707 = vmatpush.msra.mxu0 0.0
        %708 = vmatpush.msra.mxu0 0.0
        %709 = vmatpush.msra.mxu0 0.0
        %710 = vmatpush.msra.mxu0 0.0
        %711 = vmatpush.msra.mxu0 0.0
        %712 = vmatpush.msra.mxu0 0.0
        %713 = vmatpush.msra.mxu0 0.0
        %714 = vmatpush.msra.mxu0 0.0
        %715 = vmatpush.msra.mxu0 0.0
        %716 = vmatpush.msra.mxu0 %v540
        %717 = vmatpush.msra.mxu0 %v539
        %718 = vmatmul.f32.gmra.mxu0 %v700
        %v719 = vpop.f32.mrf.mxu0
        %v720 = vadd.f32 %v697, %v719
        %721 = vdwg.mxu0
        %v722 = vld [vmem:[%s5] sm:$0x1]
        %v724 = vperm.slane %v722, 0
        %v726 = vadd.f32 %v720, %v724
        %v727 = vadd.f32 %v506, %v726
        %v728 = vld [vmem:[%s6] sm:$0x1]
        %v729 = vld [vmem:[%s7] sm:$0x1]
        %v730 = vsel %vm515, %v727, 0.0
        %731 = vadd.xlane.f32.xlu0 %v730
        %v732 = vpop.xlane.xlu0 %731
        %v733 = vrcp.pop 32.0
        %v734 = vmul.f32 32.0, %v733
        %v735 = vsub.f32 1.0, %v734
        %v736 = vmul.f32 %v733, %v735
        %v737 = vadd.f32 %v733, %v736
        %vm738 = vweird.f32 %v733
        %v739 = vsel %vm738, %v733, %v737
        %v740 = vmul.f32 %v732, %v739
        %v741 = vsub.f32 %v727, %v740
        %v742 = vmul.f32 %v741, %v741
        %v743 = vsel %vm515, %v742, 0.0
        %744 = vadd.xlane.f32.xlu0 %v743
        %v745 = vpop.xlane.xlu0 %744
        %v746 = vmul.f32 %v745, %v739
        %v747 = vadd.f32 %v746, 1e-05
        %v748 = vrsqrt.pop %v747
        %v749 = vmul.f32 %v748, %v747
        %v750 = vmul.f32 %v749, %v748
        %v751 = vmul.f32 0.5, %v750
        %v752 = vsub.f32 1.5, %v751
        %v753 = vmul.f32 %v748, %v752
        %vm754 = vweird.f32 %v747
        %vm755 = vweird.f32 %v748
        %vm756 = vmor %vm754, %vm755
        %v757 = vsel %vm756, %v748, %v753
        %v758 = vmul.f32 %v741, %v757
        %v760 = vperm.slane %v728, 0
        %v762 = vmul.f32 %v758, %v760
        %v764 = vperm.slane %v729, 0
        %v766 = vadd.f32 %v762, %v764
        %v767 = vld [vmem:[%s8] sm:$0xff]
        %v768 = vld [vmem:[%s8 + $0x8] sm:$0xff]
        %v769 = vld [vmem:[%s8 + $0x10] sm:$0xff]
        %v770 = vld [vmem:[%s8 + $0x18] sm:$0xff]
        %v771 = vld [vmem:[%s9] sm:$0x1]
        %v773 = vperm.slane %v771, 0
        %v776 = vsel %vm515, %v766, 0
        %778 = vmatpush.msra.mxu0 0.0
        %779 = vmatpush.msra.mxu0 0.0
        %780 = vmatpush.msra.mxu0 0.0
        %781 = vmatpush.msra.mxu0 0.0
        %782 = vmatpush.msra.mxu0 0.0
        %783 = vmatpush.msra.mxu0 0.0
        %784 = vmatpush.msra.mxu0 0.0
        %785 = vmatpush.msra.mxu0 0.0
        %786 = vmatpush.msra.mxu0 0.0
        %787 = vmatpush.msra.mxu0 0.0
        %788 = vmatpush.msra.mxu0 0.0
        %789 = vmatpush.msra.mxu0 0.0
        %790 = vmatpush.msra.mxu0 %v770
        %791 = vmatpush.msra.mxu0 %v769
        %792 = vmatpush.msra.mxu0 %v768
        %793 = vmatpush.msra.mxu0 %v767
        %794 = vmatmul.f32.gmra.mxu0 %v776
        %v795 = vpop.f32.mrf.mxu0
        %v796 = vadd.f32 %v773, %v795
        %797 = vdwg.mxu0
        %v798 = vmax.f32 %v796, 0.0
        %v799 = vld [vmem:[%s10] sm:$0xff]
        %v800 = vld [vmem:[%s10 + $0x8] sm:$0xff]
        %v801 = vld [vmem:[%s10 + $0x10] sm:$0xff]
        %v802 = vld [vmem:[%s10 + $0x18] sm:$0xff]
        %v803 = vld [vmem:[%s10 + $0x20] sm:$0xff]
        %v804 = vld [vmem:[%s10 + $0x28] sm:$0xff]
        %v805 = vld [vmem:[%s10 + $0x30] sm:$0xff]
        %v806 = vld [vmem:[%s10 + $0x38] sm:$0xff]
        %v807 = vld [vmem:[%s11] sm:$0x1]
        %v809 = vperm.slane %v807, 0
        %vm811 = vcmask 523264
        %v813 = vsel %vm811, %v798, 0
        %815 = vmatpush.msra.mxu0 0.0
        %816 = vmatpush.msra.mxu0 0.0
        %817 = vmatpush.msra.mxu0 0.0
        %818 = vmatpush.msra.mxu0 0.0
        %819 = vmatpush.msra.mxu0 0.0
        %820 = vmatpush.msra.mxu0 0.0
        %821 = vmatpush.msra.mxu0 0.0
        %822 = vmatpush.msra.mxu0 0.0
        %823 = vmatpush.msra.mxu0 %v806
        %824 = vmatpush.msra.mxu0 %v805
        %825 = vmatpush.msra.mxu0 %v804
        %826 = vmatpush.msra.mxu0 %v803
        %827 = vmatpush.msra.mxu0 %v802
        %828 = vmatpush.msra.mxu0 %v801
        %829 = vmatpush.msra.mxu0 %v800
        %830 = vmatpush.msra.mxu0 %v799
        %831 = vmatmul.f32.gmra.mxu0 %v813
        %v832 = vpop.f32.mrf.mxu0
        %v833 = vadd.f32 %v809, %v832
        %834 = vdwg.mxu0
        %v835 = vadd.f32 %v766, %v833
        %v836 = vld [vmem:[%s12] sm:$0x1]
        %v837 = vld [vmem:[%s13] sm:$0x1]
        %v838 = vsel %vm515, %v835, 0.0
        %839 = vadd.xlane.f32.xlu0 %v838
        %v840 = vpop.xlane.xlu0 %839
        %v841 = vmul.f32 %v840, %v739
        %v842 = vsub.f32 %v835, %v841
        %v843 = vmul.f32 %v842, %v842
        %v844 = vsel %vm515, %v843, 0.0
        %845 = vadd.xlane.f32.xlu0 %v844
        %v846 = vpop.xlane.xlu0 %845
        %v847 = vmul.f32 %v846, %v739
        %v848 = vadd.f32 %v847, 1e-05
        %v849 = vrsqrt.pop %v848
        %v850 = vmul.f32 %v849, %v848
        %v851 = vmul.f32 %v850, %v849
        %v852 = vmul.f32 0.5, %v851
        %v853 = vsub.f32 1.5, %v852
        %v854 = vmul.f32 %v849, %v853
        %vm855 = vweird.f32 %v848
        %vm856 = vweird.f32 %v849
        %vm857 = vmor %vm855, %vm856
        %v858 = vsel %vm857, %v849, %v854
        %v859 = vmul.f32 %v842, %v858
        %v861 = vperm.slane %v836, 0
        %v863 = vmul.f32 %v859, %v861
        %v865 = vperm.slane %v837, 0
        %v867 = vadd.f32 %v863, %v865
        %s868 = scalar_lea.vmem %s2, 32
        %v869 = vld [vmem:[%s868] sm:$0xff]
        %v870 = vld [vmem:[%s868 + $0x8] sm:$0xff]
        %v871 = vld [vmem:[%s868 + $0x10] sm:$0xff]
        %v872 = vld [vmem:[%s868 + $0x18] sm:$0xff]
        %s873 = scalar_lea.vmem %s3, 1
        %v874 = vld [vmem:[%s873] sm:$0x1]
        %v876 = vperm.slane %v874, 0
        %v879 = vsel %vm515, %v867, 0
        %881 = vmatpush.msra.mxu0 0.0
        %882 = vmatpush.msra.mxu0 0.0
        %883 = vmatpush.msra.mxu0 0.0
        %884 = vmatpush.msra.mxu0 0.0
        %885 = vmatpush.msra.mxu0 0.0
        %886 = vmatpush.msra.mxu0 0.0
        %887 = vmatpush.msra.mxu0 0.0
        %888 = vmatpush.msra.mxu0 0.0
        %889 = vmatpush.msra.mxu0 0.0
        %890 = vmatpush.msra.mxu0 0.0
        %891 = vmatpush.msra.mxu0 0.0
        %892 = vmatpush.msra.mxu0 0.0
        %893 = vmatpush.msra.mxu0 %v872
        %894 = vmatpush.msra.mxu0 %v871
        %895 = vmatpush.msra.mxu0 %v870
        %896 = vmatpush.msra.mxu0 %v869
        %897 = vmatmul.f32.gmra.mxu0 %v879
        %v898 = vpop.f32.mrf.mxu0
        %v899 = vadd.f32 %v876, %v898
        %900 = vdwg.mxu0
        %s901 = scalar_lea.vmem %s4, 32
        %v902 = vld [vmem:[%s901] sm:$0xff]
        %v903 = vld [vmem:[%s901 + $0x8] sm:$0xff]
        %v904 = vld [vmem:[%s901 + $0x10] sm:$0xff]
        %v905 = vld [vmem:[%s901 + $0x18] sm:$0xff]
        %v906 = vmul.f32 %v899, 0.25
        %908 = vrot.lane.b32.xlu0 %v899, 96
        %v909 = vpop.permute.xlu0 %908
        %v911 = vsel %vm547, %v906, 0
        %v913 = vsel %vm547, %v909, 0
        %915 = vmatpush.xpose.msra.mxu0 0.0
        %916 = vmatpush.xpose.msra.mxu0 0.0
        %917 = vmatpush.xpose.msra.mxu0 0.0
        %918 = vmatpush.xpose.msra.mxu0 0.0
        %919 = vmatpush.xpose.msra.mxu0 0.0
        %920 = vmatpush.xpose.msra.mxu0 0.0
        %921 = vmatpush.xpose.msra.mxu0 0.0
        %922 = vmatpush.xpose.msra.mxu0 0.0
        %923 = vmatpush.xpose.msra.mxu0 0.0
        %924 = vmatpush.xpose.msra.mxu0 0.0
        %925 = vmatpush.xpose.msra.mxu0 0.0
        %926 = vmatpush.xpose.msra.mxu0 0.0
        %927 = vmatpush.xpose.msra.mxu0 0.0
        %928 = vmatpush.xpose.msra.mxu0 0.0
        %929 = vmatpush.xpose.msra.mxu0 0.0
        %930 = vmatpush.xpose.msra.mxu0 %v913
        %931 = vmatmul.f32.gmra.mxu0 %v911
        %v932 = vpop.f32.mrf.mxu0
        %v933 = vadd.f32 %v505, %v932
        %934 = vdwg.mxu0
        %v935 = vsel %vm573, %v933, -inf
        %936 = vmax.xlane.f32.xlu0 %v935
        %v937 = vpop.xlane.xlu0 %936
        %v938 = vsub.f32 %v933, %v937
        %v939 = vmul.f32 %v938, 1.442695
        %v940 = vpow.pop %v939
        %v941 = vsel %vm573, %v940, 0.0
        %942 = vadd.xlane.f32.xlu0 %v941
        %v943 = vpop.xlane.xlu0 %942
        %v944 = vrcp.pop %v943
        %v945 = vmul.f32 %v940, %v944
        %946 = vrot.lane.b32.xlu0 %v899, 64
        %v947 = vpop.permute.xlu0 %946
        %v950 = vsel %vm573, %v945, 0
        %952 = vmatpush.msra.mxu0 0.0
        %953 = vmatpush.msra.mxu0 0.0
        %954 = vmatpush.msra.mxu0 0.0
        %955 = vmatpush.msra.mxu0 0.0
        %956 = vmatpush.msra.mxu0 0.0
        %957 = vmatpush.msra.mxu0 0.0
        %958 = vmatpush.msra.mxu0 0.0
        %959 = vmatpush.msra.mxu0 0.0
        %960 = vmatpush.msra.mxu0 0.0
        %961 = vmatpush.msra.mxu0 0.0
        %962 = vmatpush.msra.mxu0 0.0
        %963 = vmatpush.msra.mxu0 0.0
        %964 = vmatpush.msra.mxu0 0.0
        %965 = vmatpush.msra.mxu0 0.0
        %966 = vmatpush.msra.mxu0 0.0
        %967 = vmatpush.msra.mxu0 %v947
        %968 = vmatmul.f32.gmra.mxu0 %v950
        %v969 = vpop.f32.mrf.mxu0
        %v970 = vadd.f32 0.0, %v969
        %971 = vdwg.mxu0
        %972 = vrot.lane.b32.xlu0 %v906, 112
        %v973 = vpop.permute.xlu0 %972
        %974 = vrot.lane.b32.xlu0 %v899, 80
        %v975 = vpop.permute.xlu0 %974
        %v976 = vsel %vm547, %v973, 0
        %v978 = vsel %vm547, %v975, 0
        %980 = vmatpush.xpose.msra.mxu0 0.0
        %981 = vmatpush.xpose.msra.mxu0 0.0
        %982 = vmatpush.xpose.msra.mxu0 0.0
        %983 = vmatpush.xpose.msra.mxu0 0.0
        %984 = vmatpush.xpose.msra.mxu0 0.0
        %985 = vmatpush.xpose.msra.mxu0 0.0
        %986 = vmatpush.xpose.msra.mxu0 0.0
        %987 = vmatpush.xpose.msra.mxu0 0.0
        %988 = vmatpush.xpose.msra.mxu0 0.0
        %989 = vmatpush.xpose.msra.mxu0 0.0
        %990 = vmatpush.xpose.msra.mxu0 0.0
        %991 = vmatpush.xpose.msra.mxu0 0.0
        %992 = vmatpush.xpose.msra.mxu0 0.0
        %993 = vmatpush.xpose.msra.mxu0 0.0
        %994 = vmatpush.xpose.msra.mxu0 0.0
        %995 = vmatpush.xpose.msra.mxu0 %v978
        %996 = vmatmul.f32.gmra.mxu0 %v976
        %v997 = vpop.f32.mrf.mxu0
        %v998 = vadd.f32 %v505, %v997
        %999 = vdwg.mxu0
        %v1000 = vsel %vm573, %v998, -inf
        %1001 = vmax.xlane.f32.xlu0 %v1000
        %v1002 = vpop.xlane.xlu0 %1001
        %v1003 = vsub.f32 %v998, %v1002
        %v1004 = vmul.f32 %v1003, 1.442695
        %v1005 = vpow.pop %v1004
        %v1006 = vsel %vm573, %v1005, 0.0
        %1007 = vadd.xlane.f32.xlu0 %v1006
        %v1008 = vpop.xlane.xlu0 %1007
        %v1009 = vrcp.pop %v1008
        %v1010 = vmul.f32 %v1005, %v1009
        %1011 = vrot.lane.b32.xlu0 %v899, 48
        %v1012 = vpop.permute.xlu0 %1011
        %v1015 = vsel %vm573, %v1010, 0
        %1017 = vmatpush.msra.mxu0 0.0
        %1018 = vmatpush.msra.mxu0 0.0
        %1019 = vmatpush.msra.mxu0 0.0
        %1020 = vmatpush.msra.mxu0 0.0
        %1021 = vmatpush.msra.mxu0 0.0
        %1022 = vmatpush.msra.mxu0 0.0
        %1023 = vmatpush.msra.mxu0 0.0
        %1024 = vmatpush.msra.mxu0 0.0
        %1025 = vmatpush.msra.mxu0 0.0
        %1026 = vmatpush.msra.mxu0 0.0
        %1027 = vmatpush.msra.mxu0 0.0
        %1028 = vmatpush.msra.mxu0 0.0
        %1029 = vmatpush.msra.mxu0 0.0
        %1030 = vmatpush.msra.mxu0 0.0
        %1031 = vmatpush.msra.mxu0 0.0
        %1032 = vmatpush.msra.mxu0 %v1012
        %1033 = vmatmul.f32.gmra.mxu0 %v1015
        %v1034 = vpop.f32.mrf.mxu0
        %v1035 = vadd.f32 0.0, %v1034
        %1036 = vdwg.mxu0
        %v1038 = vsel %vm547, %v1035, 0
        %1040 = vmatpush.msra.mxu0 0.0
        %1041 = vmatpush.msra.mxu0 0.0
        %1042 = vmatpush.msra.mxu0 0.0
        %1043 = vmatpush.msra.mxu0 0.0
        %1044 = vmatpush.msra.mxu0 0.0
        %1045 = vmatpush.msra.mxu0 0.0
        %1046 = vmatpush.msra.mxu0 0.0
        %1047 = vmatpush.msra.mxu0 0.0
        %1048 = vmatpush.msra.mxu0 0.0
        %1049 = vmatpush.msra.mxu0 0.0
        %1050 = vmatpush.msra.mxu0 0.0
        %1051 = vmatpush.msra.mxu0 0.0
        %1052 = vmatpush.msra.mxu0 0.0
        %1053 = vmatpush.msra.mxu0 0.0
        %1054 = vmatpush.msra.mxu0 %v905
        %1055 = vmatpush.msra.mxu0 %v904
        %1056 = vmatmul.f32.gmra.mxu0 %v1038
        %v1057 = vpop.f32.mrf.mxu0
        %v1058 = vadd.f32 0.0, %v1057
        %1059 = vdwg.mxu0
        %v1061 = vsel %vm547, %v970, 0
        %1063 = vmatpush.msra.mxu0 0.0
        %1064 = vmatpush.msra.mxu0 0.0
        %1065 = vmatpush.msra.mxu0 0.0
        %1066 = vmatpush.msra.mxu0 0.0
        %1067 = vmatpush.msra.mxu0 0.0
        %1068 = vmatpush.msra.mxu0 0.0
        %1069 = vmatpush.msra.mxu0 0.0
        %1070 = vmatpush.msra.mxu0 0.0
        %1071 = vmatpush.msra.mxu0 0.0
        %1072 = vmatpush.msra.mxu0 0.0
        %1073 = vmatpush.msra.mxu0 0.0
        %1074 = vmatpush.msra.mxu0 0.0
        %1075 = vmatpush.msra.mxu0 0.0
        %1076 = vmatpush.msra.mxu0 0.0
        %1077 = vmatpush.msra.mxu0 %v903
        %1078 = vmatpush.msra.mxu0 %v902
        %1079 = vmatmul.f32.gmra.mxu0 %v1061
        %v1080 = vpop.f32.mrf.mxu0
        %v1081 = vadd.f32 %v1058, %v1080
        %1082 = vdwg.mxu0
        %s1083 = scalar_lea.vmem %s5, 1
        %v1084 = vld [vmem:[%s1083] sm:$0x1]
        %v1086 = vperm.slane %v1084, 0
        %v1088 = vadd.f32 %v1081, %v1086
        %v1089 = vadd.f32 %v867, %v1088
        %s1090 = scalar_lea.vmem %s6, 1
        %v1091 = vld [vmem:[%s1090] sm:$0x1]
        %s1092 = scalar_lea.vmem %s7, 1
        %v1093 = vld [vmem:[%s1092] sm:$0x1]
        %v1094 = vsel %vm515, %v1089, 0.0
        %1095 = vadd.xlane.f32.xlu0 %v1094
        %v1096 = vpop.xlane.xlu0 %1095
        %v1097 = vmul.f32 %v1096, %v739
        %v1098 = vsub.f32 %v1089, %v1097
        %v1099 = vmul.f32 %v1098, %v1098
        %v1100 = vsel %vm515, %v1099, 0.0
        %1101 = vadd.xlane.f32.xlu0 %v1100
        %v1102 = vpop.xlane.xlu0 %1101
        %v1103 = vmul.f32 %v1102, %v739
        %v1104 = vadd.f32 %v1103, 1e-05
        %v1105 = vrsqrt.pop %v1104
        %v1106 = vmul.f32 %v1105, %v1104
        %v1107 = vmul.f32 %v1106, %v1105
        %v1108 = vmul.f32 0.5, %v1107
        %v1109 = vsub.f32 1.5, %v1108
        %v1110 = vmul.f32 %v1105, %v1109
        %vm1111 = vweird.f32 %v1104
        %vm1112 = vweird.f32 %v1105
        %vm1113 = vmor %vm1111, %vm1112
        %v1114 = vsel %vm1113, %v1105, %v1110
        %v1115 = vmul.f32 %v1098, %v1114
        %v1117 = vperm.slane %v1091, 0
        %v1119 = vmul.f32 %v1115, %v1117
        %v1121 = vperm.slane %v1093, 0
        %v1123 = vadd.f32 %v1119, %v1121
        %s1124 = scalar_lea.vmem %s8, 32
        %v1125 = vld [vmem:[%s1124] sm:$0xff]
        %v1126 = vld [vmem:[%s1124 + $0x8] sm:$0xff]
        %v1127 = vld [vmem:[%s1124 + $0x10] sm:$0xff]
        %v1128 = vld [vmem:[%s1124 + $0x18] sm:$0xff]
        %s1129 = scalar_lea.vmem %s9, 1
        %v1130 = vld [vmem:[%s1129] sm:$0x1]
        %v1132 = vperm.slane %v1130, 0
        %v1135 = vsel %vm515, %v1123, 0
        %1137 = vmatpush.msra.mxu0 0.0
        %1138 = vmatpush.msra.mxu0 0.0
        %1139 = vmatpush.msra.mxu0 0.0
        %1140 = vmatpush.msra.mxu0 0.0
        %1141 = vmatpush.msra.mxu0 0.0
        %1142 = vmatpush.msra.mxu0 0.0
        %1143 = vmatpush.msra.mxu0 0.0
        %1144 = vmatpush.msra.mxu0 0.0
        %1145 = vmatpush.msra.mxu0 0.0
        %1146 = vmatpush.msra.mxu0 0.0
        %1147 = vmatpush.msra.mxu0 0.0
        %1148 = vmatpush.msra.mxu0 0.0
        %1149 = vmatpush.msra.mxu0 %v1128
        %1150 = vmatpush.msra.mxu0 %v1127
        %1151 = vmatpush.msra.mxu0 %v1126
        %1152 = vmatpush.msra.mxu0 %v1125
        %1153 = vmatmul.f32.gmra.mxu0 %v1135
        %v1154 = vpop.f32.mrf.mxu0
        %v1155 = vadd.f32 %v1132, %v1154
        %1156 = vdwg.mxu0
        %v1157 = vmax.f32 %v1155, 0.0
        %s1158 = scalar_lea.vmem %s10, 64
        %v1159 = vld [vmem:[%s1158] sm:$0xff]
        %v1160 = vld [vmem:[%s1158 + $0x8] sm:$0xff]
        %v1161 = vld [vmem:[%s1158 + $0x10] sm:$0xff]
        %v1162 = vld [vmem:[%s1158 + $0x18] sm:$0xff]
        %v1163 = vld [vmem:[%s1158 + $0x20] sm:$0xff]
        %v1164 = vld [vmem:[%s1158 + $0x28] sm:$0xff]
        %v1165 = vld [vmem:[%s1158 + $0x30] sm:$0xff]
        %v1166 = vld [vmem:[%s1158 + $0x38] sm:$0xff]
        %s1167 = scalar_lea.vmem %s11, 1
        %v1168 = vld [vmem:[%s1167] sm:$0x1]
        %v1170 = vperm.slane %v1168, 0
        %v1173 = vsel %vm811, %v1157, 0
        %1175 = vmatpush.msra.mxu0 0.0
        %1176 = vmatpush.msra.mxu0 0.0
        %1177 = vmatpush.msra.mxu0 0.0
        %1178 = vmatpush.msra.mxu0 0.0
        %1179 = vmatpush.msra.mxu0 0.0
        %1180 = vmatpush.msra.mxu0 0.0
        %1181 = vmatpush.msra.mxu0 0.0
        %1182 = vmatpush.msra.mxu0 0.0
        %1183 = vmatpush.msra.mxu0 %v1166
        %1184 = vmatpush.msra.mxu0 %v1165
        %1185 = vmatpush.msra.mxu0 %v1164
        %1186 = vmatpush.msra.mxu0 %v1163
        %1187 = vmatpush.msra.mxu0 %v1162
        %1188 = vmatpush.msra.mxu0 %v1161
        %1189 = vmatpush.msra.mxu0 %v1160
        %1190 = vmatpush.msra.mxu0 %v1159
        %1191 = vmatmul.f32.gmra.mxu0 %v1173
        %v1192 = vpop.f32.mrf.mxu0
        %v1193 = vadd.f32 %v1170, %v1192
        %1194 = vdwg.mxu0
        %v1195 = vadd.f32 %v1123, %v1193
        %s1196 = scalar_lea.vmem %s12, 1
        %v1197 = vld [vmem:[%s1196] sm:$0x1]
        %s1198 = scalar_lea.vmem %s13, 1
        %v1199 = vld [vmem:[%s1198] sm:$0x1]
        %v1200 = vsel %vm515, %v1195, 0.0
        %1201 = vadd.xlane.f32.xlu0 %v1200
        %v1202 = vpop.xlane.xlu0 %1201
        %v1203 = vmul.f32 %v1202, %v739
        %v1204 = vsub.f32 %v1195, %v1203
        %v1205 = vmul.f32 %v1204, %v1204
        %v1206 = vsel %vm515, %v1205, 0.0
        %1207 = vadd.xlane.f32.xlu0 %v1206
        %v1208 = vpop.xlane.xlu0 %1207
        %v1209 = vmul.f32 %v1208, %v739
        %v1210 = vadd.f32 %v1209, 1e-05
        %v1211 = vrsqrt.pop %v1210
        %v1212 = vmul.f32 %v1211, %v1210
        %v1213 = vmul.f32 %v1212, %v1211
        %v1214 = vmul.f32 0.5, %v1213
        %v1215 = vsub.f32 1.5, %v1214
        %v1216 = vmul.f32 %v1211, %v1215
        %vm1217 = vweird.f32 %v1210
        %vm1218 = vweird.f32 %v1211
        %vm1219 = vmor %vm1217, %vm1218
        %v1220 = vsel %vm1219, %v1211, %v1216
        %v1221 = vmul.f32 %v1204, %v1220
        %v1223 = vperm.slane %v1197, 0
        %v1225 = vmul.f32 %v1221, %v1223
        %v1227 = vperm.slane %v1199, 0
        %v1229 = vadd.f32 %v1225, %v1227
        %v1230 = vld [vmem:[%s14] sm:$0x1]
        %v1232 = vperm.slane %v1230, 0
        %v1234 = vmul.f32 %v1229, %v1232
        %v1235 = vsel %vm515, %v1234, 0.0
        %1236 = vadd.xlane.f32.xlu0 %v1235
        %v1237 = vpop.xlane.xlu0 %1236
        %v1238 = vld [vmem:[#allocation4] sm:$0x1]
        %1240 = vset.pattern.permute.xlu0 0
        %1241 = vperm.xlu0 %1240, %v1238
        %v1242 = vpop.permute.xlu0 %1241
        %v1244 = vperm.slane %v1242, 0
        %v1245 = vadd.f32 %v1237, %v1244
        %v1247 = vperm.slane %v1245, %v501
        %vm1249 = vcmask 57344
        %1250 = vst.msk [vmem:[%s495] sm:$0x1] %vm1249, %v1247
        %s1251 = sand.u32 %s368, 1
        %s1252 = scalar_lea.sflag [#allocation6], %s1251
        %s1253 = sand.u32 %s368, 1
        %s1254 = scalar_lea.vmem [#allocation5], %s1253
        // Predicated region
        $region81: #{duration_predictor_forward.1} parent=79 // pred_check
          %p1255 = pneg %p378
        $region82: #{duration_predictor_forward.1} parent=79 // pred_check_branch
          %1257 = sbr.rel (%p1255) target = $region84
        $region83: #{duration_predictor_forward.1} parent=79 // pred_region
          %1259 = vsyncadd %s1252, 0
          %s1260 = scalar_lea.hbm %s16, %s40
          %s1262 = sshll.u32 %s1254, 4
          %s1263 = int_to_ptr.vmem [resolvable:$true] %s1262
          %s1264 = sshll.u32 %s1260, 4
          %s1265 = int_to_ptr.hbm [resolvable:$true] %s1264
          %1267 = dma.vmem_to_hbm [thread:$0]  %s1263, 16, %s1265, %s1252
        $region84: #{duration_predictor_forward.1} parent=79 // pred_fallthru
          _
      $region80: #{duration_predictor_forward.1} parent=5 // pred_fallthru
        _
      %p1268 = scmp.le.s32.totalorder 2, %s35
      // Predicated region
      $region85: #{duration_predictor_forward.1} parent=5 // pred_check
        %p1269 = pneg %p1268
      $region86: #{duration_predictor_forward.1} parent=5 // pred_check_branch
        %1271 = sbr.rel (%p1269) target = $region88
      $region87: #{duration_predictor_forward.1} parent=5 // pred_region
        %s1272 = ssub.s32 %s35, 2
        // Predicated region
        $region89: #{duration_predictor_forward.1} parent=87 // pred_check
          %p1273 = pneg %p384
        $region90: #{duration_predictor_forward.1} parent=87 // pred_check_branch
          %1275 = sbr.rel (%p1273) target = $region92
        $region91: #{duration_predictor_forward.1} parent=87 // pred_region
          %s1276 = sand.u32 %s369, 1
          %s1277 = scalar_lea.sflag [#allocation6], %s1276
          %s1278 = sand.u32 %s369, 1
          %s1279 = scalar_lea.vmem [#allocation5], %s1278
          %1281 = dma.done %s1277, 16
        $region92: #{duration_predictor_forward.1} parent=87 // pred_fallthru
          _
      $region88: #{duration_predictor_forward.1} parent=5 // pred_fallthru
        _
    $region6: #{duration_predictor_forward.1} parent=1 // loop_footer
      %s39 = sadd.s32 1, %s35
    $region7: #{duration_predictor_forward.1} parent=1 // loop_footer_branch
      %34 = sbr.rel target = $region3
    $region8: #{duration_predictor_forward.1} parent=1 // loop_exit
      _
    %1282 = vsyncpa [#allocation6], 1
    %s1283 = scalar_lea.sflag [#allocation6], 1
    %1284 = vsyncpa %s1283, 1

</llo_original>
